<compile_context>
chip_gen: v7x
topology: tpu7x:2x2x1
jax: 0.10.0
libtpu: 0.0.40
codegen_flags: <defaults>
</compile_context>

<pallas_src>
import numpy as np
import jax
import jax.numpy as jnp
from jax import lax
from jax.experimental import pallas as pl
from jax.experimental.pallas import tpu as pltpu

CONV_PAD = 1
K_SIZE = 8
BN_EPS = 1e-5


# ------------------------------- small helpers -------------------------------
def _round_up(x, m):
    return ((x + m - 1) // m) * m


def _tap_group(cin):
    """Taps per 128-lane im2col chunk (4 for Cin=32, 2 for Cin=64, else 1)."""
    g = 128 // cin if (cin <= 128 and 128 % cin == 0) else 1
    g = min(max(g, 1), K_SIZE)
    while g > 1 and K_SIZE % g:
        g -= 1
    return g


def _stage_geometry(L_in, channels, subl):
    """Static per-stage geometry for conv(pad=1, k=8) + blur(filt 2, stride 2)."""
    cfgs = []
    Lin = L_in
    for cin, cout in zip(channels[:-1], channels[1:]):
        Lp = Lin + 2 * CONV_PAD                       # zero-padded conv input len
        Lc = Lp - K_SIZE + 1                          # conv output len
        Lcp = _round_up(Lc, subl)                     # sublane-aligned M segment
        Lout = (Lc - 1) // 2 + 1                      # reflect pad_r, filt 2, stride 2
        cfgs.append(dict(Lin=Lin, Lp=Lp, Lc=Lc, Lcp=Lcp, Lout=Lout,
                         Cin=cin, Cout=cout))
        Lin = Lout
    return cfgs


def _vmem_bytes(shape, dtype):
    """Rough tile-padded VMEM footprint of one buffer (for budget assertions)."""
    it = jnp.dtype(dtype).itemsize
    lead = int(np.prod(shape[:-2])) if len(shape) > 2 else 1
    rows = shape[-2] if len(shape) >= 2 else 1
    return lead * _round_up(rows, 8) * _round_up(shape[-1], 128) * it


# ----------------------------- fused Pallas kernel ----------------------------
def make_fused_kernel(cfgs, batch_block, compute_dtype):
    """Builds the fused 3-stage kernel body (all shapes / config are static)."""
    n_stage = len(cfgs)
    n_inner = n_stage - 1
    bb = batch_block

    def kernel(*refs):
        x_ref = refs[0]                                        # (bb*Lcp1, K*C0) im2col
        w_refs = [refs[1 + 2 * s] for s in range(n_stage)]     # (K*Cin, Cout)
        sh_refs = [refs[2 + 2 * s] for s in range(n_stage)]    # (1, Cout), f32
        o_ref = refs[1 + 2 * n_stage]                          # (bb, Lout3, Cout3)
        scr = refs[2 + 2 * n_stage:]
        pad_refs = [None] + list(scr[:n_inner])                # (bb, Lp, Cin)
        im_refs = [None] + list(scr[n_inner:2 * n_inner])      # (bb*Lcp, K*Cin)
        y_refs = list(scr[2 * n_inner:])                       # (bb*Lcp, Cout), f32

        # ---- per-step constant init (hoisted out of the batch loop) ---------
        for s in range(1, n_stage):
            Lp, Lc, Lcp, Cin = (cfgs[s][k] for k in ("Lp", "Lc", "Lcp", "Cin"))
            zrow = jnp.zeros((bb, CONV_PAD, Cin), compute_dtype)
            pad_refs[s][:, 0:CONV_PAD, :] = zrow               # conv left zero pad
            pad_refs[s][:, Lp - CONV_PAD:Lp, :] = zrow         # conv right zero pad
            if Lcp > Lc:                                       # keep M-stack tails clean
                ztail = jnp.zeros((Lcp - Lc, K_SIZE * Cin), compute_dtype)
                for bi in range(bb):
                    im_refs[s][bi * Lcp + Lc: bi * Lcp + Lcp, :] = ztail

        def conv_bn_relu(im, s):
            # One MXU matmul per stage per grid step (M = bb*Lcp), f32 accumulate.
            y = jnp.dot(im, w_refs[s][...], preferred_element_type=jnp.float32)
            return jnp.maximum(y + sh_refs[s][...], 0.0)       # BN shift + ReLU (VPU)

        def blur(y, cfg, y_ref, emit):
            """y: (bb*Lcp, Cout) f32.  One stacked store, then per batch: reflected
            edge row + even/odd strided reads -> emit(bi, (Lout, Cout) f32)."""
            Lc, Lcp, Lout = cfg["Lc"], cfg["Lcp"], cfg["Lout"]
            y_ref[...] = y
            for bi in range(bb):
                base = bi * Lcp
                if 2 * Lout > Lc:          # odd Lc: reflected edge row = y[Lc-2]
                    y_ref[base + Lc: base + Lc + 1, :] = \
                        y[base + Lc - 2: base + Lc - 1, :]
                even = y_ref[pl.ds(base, Lout, stride=2), :]
                odd = y_ref[pl.ds(base + 1, Lout, stride=2), :]
                emit(bi, 0.5 * (even + odd))

        def emit_to_pad(s_next):
            Lin, pad_ref = cfgs[s_next]["Lin"], pad_refs[s_next]

            def emit(bi, h):               # write next stage's conv input rows
                pad_ref[bi, CONV_PAD:CONV_PAD + Lin, :] = h.astype(compute_dtype)
            return emit

        def emit_to_out(bi, h):
            o_ref[bi] = h.astype(o_ref.dtype)

        # ---- stage 1: wrapper-built, batch-stacked im2col -> one matmul -----
        blur(conv_bn_relu(x_ref[...], 0), cfgs[0], y_refs[0],
             emit_to_pad(1) if n_stage > 1 else emit_to_out)

        # ---- stages 2..n: lane-aligned in-kernel im2col -> one matmul each --
        for s in range(1, n_stage):
            cfg = cfgs[s]
            Lc, Lcp, Cin = cfg["Lc"], cfg["Lcp"], cfg["Cin"]
            group = _tap_group(Cin)
            cw = group * Cin                                    # chunk width (=128 here)
            for bi in range(bb):
                for g in range(K_SIZE // group):
                    chunk = jnp.concatenate(
                        [pad_refs[s][bi, k:k + Lc, :]
                         for k in range(g * group, (g + 1) * group)], axis=-1)
                    im_refs[s][bi * Lcp: bi * Lcp + Lc,
                               g * cw:(g + 1) * cw] = chunk
            y = conv_bn_relu(im_refs[s][...], s)
            blur(y, cfg, y_refs[s],
                 emit_to_pad(s + 1) if s + 1 < n_stage else emit_to_out)

    return kernel


# ------------------------------ glue / params --------------------------------
def prepare_params(params, compute_dtype):
    """Fold BN scale into conv weights; reshape to im2col layout (K*Cin, Cout)."""
    prepped = []
    for p in params:
        W = p["W"]                                     # torch layout (Cout, Cin, K)
        Cout, Cin, K = W.shape
        W2 = jnp.transpose(W, (2, 1, 0)).reshape(K * Cin, Cout) * p["scale"][None, :]
        prepped.append(dict(W2=W2.astype(compute_dtype),
                            shift=p["shift"][None, :].astype(jnp.float32)))
    return prepped


def _stage1_im2col(x_in, Lc1, Lcp1, compute_dtype):
    """Wrapper-side (pure XLA) stage-1 im2col: (B, L, C0) -> (B*Lcp1, K*C0).
    Layout plumbing only: rows become K*C0-lane (128-byte) segments instead of a
    4-lane input block (16-byte DMA rows, 32x lane-padded VMEM tile)."""
    B, _, C0 = x_in.shape
    xpad = jnp.pad(x_in, ((0, 0), (CONV_PAD, CONV_PAD), (0, 0)))
    cols = jnp.concatenate([xpad[:, k:k + Lc1, :] for k in range(K_SIZE)], axis=-1)
    cols = jnp.pad(cols, ((0, 0), (0, Lcp1 - Lc1), (0, 0)))     # zero M-stack tails
    return cols.reshape(B * Lcp1, K_SIZE * C0).astype(compute_dtype)


def fcn_blur_forward(x_in, params, *, batch_block=1, compute_dtype=jnp.float32):
    """x_in: (B, L, n_channels) channels-last.  Returns (None, out) with out in
    channels-last layout (B, L_out, C_out) so the final stores stay lane-dense.

    batch_block=1   -> grid=(B,), "parallel": shards across TensorCores (v7x).
    batch_block=B   -> grid=(1,): whole batch M-stacked into each matmul (v5e/v6e).
    """
    B, L, C0 = x_in.shape
    assert B % batch_block == 0
    subl = 16 if jnp.dtype(compute_dtype).itemsize == 2 else 8
    channels = [C0] + [int(p["W"].shape[0]) for p in params]
    cfgs = _stage_geometry(L, channels, subl)
    prepped = prepare_params(params, compute_dtype)
    Lout3, Cout3 = cfgs[-1]["Lout"], cfgs[-1]["Cout"]
    Lcp1 = cfgs[0]["Lcp"]

    x_im = _stage1_im2col(x_in, cfgs[0]["Lc"], Lcp1, compute_dtype)

    kernel = make_fused_kernel(cfgs, batch_block, compute_dtype)

    in_specs = [pl.BlockSpec((batch_block * Lcp1, K_SIZE * C0), lambda b: (b, 0))]
    args = [x_im]
    for cfg, p in zip(cfgs, prepped):
        in_specs.append(pl.BlockSpec((K_SIZE * cfg["Cin"], cfg["Cout"]),
                                     lambda b: (0, 0)))
        in_specs.append(pl.BlockSpec((1, cfg["Cout"]), lambda b: (0, 0)))
        args += [p["W2"], p["shift"]]

    # Scratch: conv-pad buffers + M-stacked im2col slabs (compute_dtype) and
    # pre-pool conv outputs (f32).  Stage 1 needs neither pad nor im scratch.
    scratch_defs = []
    for cfg in cfgs[1:]:
        scratch_defs.append(((batch_block, cfg["Lp"], cfg["Cin"]), compute_dtype))
    for cfg in cfgs[1:]:
        scratch_defs.append(((batch_block * cfg["Lcp"], K_SIZE * cfg["Cin"]),
                             compute_dtype))
    for cfg in cfgs:
        scratch_defs.append(((batch_block * cfg["Lcp"], cfg["Cout"]), jnp.float32))
    scratch_shapes = [pltpu.VMEM(s, d) for s, d in scratch_defs]

    # Explicit VMEM budget (review item): scratch + double-buffered blocks must
    # stay well under the 32 MiB default scoped limit (v7x physical VMEM = 64 MiB).
    blocks = [((batch_block * Lcp1, K_SIZE * C0), compute_dtype),
              ((batch_block, Lout3, Cout3), jnp.float32)]
    for cfg in cfgs:
        blocks.append(((K_SIZE * cfg["Cin"], cfg["Cout"]), compute_dtype))
        blocks.append(((1, cfg["Cout"]), jnp.float32))
    vmem_est = (sum(_vmem_bytes(s, d) for s, d in scratch_defs)
                + 2 * sum(_vmem_bytes(s, d) for s, d in blocks))
    assert vmem_est < 32 * 1024 * 1024, f"VMEM budget exceeded: {vmem_est} bytes"

    out = pl.pallas_call(
        kernel,
        out_shape=jax.ShapeDtypeStruct((B, Lout3, Cout3), jnp.float32),
        grid=(B // batch_block,),
        in_specs=in_specs,
        out_specs=pl.BlockSpec((batch_block, Lout3, Cout3), lambda b: (b, 0, 0)),
        scratch_shapes=scratch_shapes,
        compiler_params=pltpu.CompilerParams(dimension_semantics=("parallel",)),
    )(*args)
    return None, out


def init_params(key, n_channels, out_channels=128):
    chans = [n_channels, 32, 64, out_channels]
    params = []
    for i in range(3):
        cin, cout = chans[i], chans[i + 1]
        key, kw, kg, kb = jax.random.split(key, 4)
        W = 0.1 * jax.random.normal(kw, (cout, cin, K_SIZE), jnp.float32)  # (O,I,K)
        gamma = 1.0 + 0.1 * jax.random.normal(kg, (cout,), jnp.float32)
        beta = 0.1 * jax.random.normal(kb, (cout,), jnp.float32)
        run_mean = jnp.zeros((cout,), jnp.float32)   # eval-mode BN running stats
        run_var = jnp.ones((cout,), jnp.float32)
        scale = gamma / jnp.sqrt(run_var + BN_EPS)
        shift = beta - run_mean * scale
        params.append(dict(W=W, scale=scale, shift=shift))
    return params


# --------------------------------- reference ----------------------------------
def ref_forward(x_in, params):
    x = jnp.transpose(x_in, (0, 2, 1))               # NCL
    for p in params:
        W = p["W"]
        x = lax.conv_general_dilated(
            x, W, window_strides=(1,), padding=[(CONV_PAD, CONV_PAD)],
            dimension_numbers=("NCW", "OIW", "NCW"))
        x = x * p["scale"][None, :, None] + p["shift"][None, :, None]
        x = jnp.maximum(x, 0.0)
        xpad = jnp.pad(x, ((0, 0), (0, 0), (0, 1)), mode="reflect")
        Lout = (xpad.shape[2] - 2) // 2 + 1
        x = 0.5 * (xpad[:, :, 0:2 * Lout:2] + xpad[:, :, 1:2 * Lout:2])
    return x


# ----------------------------------- main --------------------------------------
if __name__ == "__main__":
    B, L, n_channels = 2, 64, 4
    key = jax.random.PRNGKey(0)
    key, kx = jax.random.split(key)
    x_in = jax.random.normal(kx, (B, L, n_channels), jnp.float32)
    params = init_params(key, n_channels, out_channels=128)

    ref = jax.block_until_ready(ref_forward(x_in, params))       # (B, C_out, L_out)
    ref_cl = np.transpose(np.asarray(ref), (0, 2, 1))            # channels-last

    fwd = jax.jit(fcn_blur_forward, static_argnames=("batch_block", "compute_dtype"))

    # f32, batch-parallel grid (v7x: both TensorCores get a grid step).
    _, out = fwd(x_in, params, batch_block=1)
    out = np.asarray(jax.block_until_ready(out))
    assert out.shape == (B, 4, 128), out.shape
    np.testing.assert_allclose(out, ref_cl, rtol=2e-4, atol=2e-4)

    # f32, whole batch folded -> largest M-stacked matmuls (v5e/v6e path).
    _, out_fold = fwd(x_in, params, batch_block=B)
    out_fold = np.asarray(jax.block_until_ready(out_fold))
    np.testing.assert_allclose(out_fold, ref_cl, rtol=2e-4, atol=2e-4)

    # bf16 MXU operands + bf16 pad/im2col scratch, f32 accumulate (v6e/v7x).
    _, out_bf16 = fwd(x_in, params, batch_block=B, compute_dtype=jnp.bfloat16)
    out_bf16 = np.asarray(jax.block_until_ready(out_bf16))
    assert np.max(np.abs(out_bf16 - ref_cl)) < 0.25

    print("KERNEL_OK")
</pallas_src>

<mosaic_0001>
module attributes {stable_mosaic.version = 11 : i64} {
  func.func @kernel(%arg0: i32, %arg1: memref<64x32xf32, #tpu.memory_space<vmem>>, %arg2: memref<32x32xf32, #tpu.memory_space<vmem>>, %arg3: memref<1x32xf32, #tpu.memory_space<vmem>>, %arg4: memref<256x64xf32, #tpu.memory_space<vmem>>, %arg5: memref<1x64xf32, #tpu.memory_space<vmem>>, %arg6: memref<512x128xf32, #tpu.memory_space<vmem>>, %arg7: memref<1x128xf32, #tpu.memory_space<vmem>>, %arg8: memref<1x4x128xf32, #tpu.memory_space<vmem>>, %arg9: memref<1x32x32xf32, #tpu.memory_space<vmem>>, %arg10: memref<1x15x64xf32, #tpu.memory_space<vmem>>, %arg11: memref<32x256xf32, #tpu.memory_space<vmem>>, %arg12: memref<8x512xf32, #tpu.memory_space<vmem>>, %arg13: memref<64x32xf32, #tpu.memory_space<vmem>>, %arg14: memref<32x64xf32, #tpu.memory_space<vmem>>, %arg15: memref<8x128xf32, #tpu.memory_space<vmem>>) attributes {dimension_semantics = [#tpu.dimension_semantics<parallel>], iteration_bounds = array<i64: 2>, scalar_prefetch = 0 : i64, scratch_operands = 7 : i64, tpu.core_type = #tpu.core_type<tc>, window_params = [{transform_indices = @transform_0, window_bounds = array<i64: 64, 32>}, {pipeline_mode = #tpu.pipeline_mode<synchronous>, transform_indices = @transform_1, window_bounds = array<i64: 32, 32>}, {pipeline_mode = #tpu.pipeline_mode<synchronous>, transform_indices = @transform_2, window_bounds = array<i64: 1, 32>}, {pipeline_mode = #tpu.pipeline_mode<synchronous>, transform_indices = @transform_3, window_bounds = array<i64: 256, 64>}, {pipeline_mode = #tpu.pipeline_mode<synchronous>, transform_indices = @transform_4, window_bounds = array<i64: 1, 64>}, {pipeline_mode = #tpu.pipeline_mode<synchronous>, transform_indices = @transform_5, window_bounds = array<i64: 512, 128>}, {pipeline_mode = #tpu.pipeline_mode<synchronous>, transform_indices = @transform_6, window_bounds = array<i64: 1, 128>}, {transform_indices = @transform_7, window_bounds = array<i64: 1, 4, 128>}]} {
    %cst = arith.constant 0.000000e+00 : f32
    %0 = vector.broadcast %cst : f32 to vector<1x1x32xf32>
    %c0 = arith.constant 0 : index
    %c0_0 = arith.constant 0 : index
    %c0_1 = arith.constant 0 : index
    %1 = vector.load %arg9[%c0, %c0_0, %c0_1] : memref<1x32x32xf32, #tpu.memory_space<vmem>>, vector<1x1x32xf32>
    tpu.vector_store %arg9[%c0, %c0_0, %c0_1], %0 {strides = array<i32>} : memref<1x32x32xf32, #tpu.memory_space<vmem>>, vector<1x1x32xf32>,
    %c0_2 = arith.constant 0 : index
    %c31 = arith.constant 31 : index
    %c0_3 = arith.constant 0 : index
    %2 = vector.load %arg9[%c0_2, %c31, %c0_3] : memref<1x32x32xf32, #tpu.memory_space<vmem>>, vector<1x1x32xf32>
    tpu.vector_store %arg9[%c0_2, %c31, %c0_3], %0 {strides = array<i32>} : memref<1x32x32xf32, #tpu.memory_space<vmem>>, vector<1x1x32xf32>,
    %cst_4 = arith.constant 0.000000e+00 : f32
    %3 = vector.broadcast %cst_4 : f32 to vector<7x256xf32>
    %c25 = arith.constant 25 : index
    %c0_5 = arith.constant 0 : index
    %4 = vector.load %arg11[%c25, %c0_5] : memref<32x256xf32, #tpu.memory_space<vmem>>, vector<7x256xf32>
    tpu.vector_store %arg11[%c25, %c0_5], %3 {strides = array<i32>} : memref<32x256xf32, #tpu.memory_space<vmem>>, vector<7x256xf32>,
    %cst_6 = arith.constant 0.000000e+00 : f32
    %5 = vector.broadcast %cst_6 : f32 to vector<1x1x64xf32>
    %c0_7 = arith.constant 0 : index
    %c0_8 = arith.constant 0 : index
    %c0_9 = arith.constant 0 : index
    %6 = vector.load %arg10[%c0_7, %c0_8, %c0_9] : memref<1x15x64xf32, #tpu.memory_space<vmem>>, vector<1x1x64xf32>
    tpu.vector_store %arg10[%c0_7, %c0_8, %c0_9], %5 {strides = array<i32>} : memref<1x15x64xf32, #tpu.memory_space<vmem>>, vector<1x1x64xf32>,
    %c0_10 = arith.constant 0 : index
    %c14 = arith.constant 14 : index
    %c0_11 = arith.constant 0 : index
    %7 = vector.load %arg10[%c0_10, %c14, %c0_11] : memref<1x15x64xf32, #tpu.memory_space<vmem>>, vector<1x1x64xf32>
    tpu.vector_store %arg10[%c0_10, %c14, %c0_11], %5 {strides = array<i32>} : memref<1x15x64xf32, #tpu.memory_space<vmem>>, vector<1x1x64xf32>,
    %c0_12 = arith.constant 0 : index
    %c0_13 = arith.constant 0 : index
    %8 = vector.load %arg1[%c0_12, %c0_13] : memref<64x32xf32, #tpu.memory_space<vmem>>, vector<64x32xf32>
    %c0_14 = arith.constant 0 : index
    %c0_15 = arith.constant 0 : index
    %9 = vector.load %arg2[%c0_14, %c0_15] : memref<32x32xf32, #tpu.memory_space<vmem>>, vector<32x32xf32>
    %cst_16 = arith.constant dense<0.000000e+00> : vector<64x32xf32>
    %10 = tpu.matmul %8, %9, %cst_16 {dimension_numbers = #tpu.dot_dimension_numbers<[1], [0], [0], [1], [0, 0, 1, 1], [], []>} : vector<64x32xf32>, vector<32x32xf32>, vector<64x32xf32> -> vector<64x32xf32>
    %c0_17 = arith.constant 0 : index
    %c0_18 = arith.constant 0 : index
    %11 = vector.load %arg3[%c0_17, %c0_18] : memref<1x32xf32, #tpu.memory_space<vmem>>, vector<1x32xf32>
    %12 = vector.broadcast %11 : vector<1x32xf32> to vector<64x32xf32>
    %13 = arith.addf %10, %12 : vector<64x32xf32>
    %cst_19 = arith.constant 0.000000e+00 : f32
    %14 = vector.broadcast %cst_19 : f32 to vector<64x32xf32>
    %15 = arith.maximumf %13, %14 : vector<64x32xf32>
    %c0_20 = arith.constant 0 : index
    %c0_21 = arith.constant 0 : index
    %16 = vector.load %arg13[%c0_20, %c0_21] : memref<64x32xf32, #tpu.memory_space<vmem>>, vector<64x32xf32>
    tpu.vector_store %arg13[%c0_20, %c0_21], %15 {strides = array<i32>} : memref<64x32xf32, #tpu.memory_space<vmem>>, vector<64x32xf32>,
    %17 = vector.extract_strided_slice %15 {offsets = [57, 0], sizes = [1, 32], strides = [1, 1]} : vector<64x32xf32> to vector<1x32xf32>
    %c59 = arith.constant 59 : index
    %c0_22 = arith.constant 0 : index
    %18 = vector.load %arg13[%c59, %c0_22] : memref<64x32xf32, #tpu.memory_space<vmem>>, vector<1x32xf32>
    tpu.vector_store %arg13[%c59, %c0_22], %17 {strides = array<i32>} : memref<64x32xf32, #tpu.memory_space<vmem>>, vector<1x32xf32>,
    %c0_23 = arith.constant 0 : index
    %c0_24 = arith.constant 0 : index
    %19 = tpu.strided_load %arg13[%c0_23, %c0_24] {strides = array<i32: 2, 1>} : memref<64x32xf32, #tpu.memory_space<vmem>>, vector<30x32xf32>
    %c1 = arith.constant 1 : index
    %c0_25 = arith.constant 0 : index
    %20 = tpu.strided_load %arg13[%c1, %c0_25] {strides = array<i32: 2, 1>} : memref<64x32xf32, #tpu.memory_space<vmem>>, vector<30x32xf32>
    %21 = arith.addf %19, %20 : vector<30x32xf32>
    %cst_26 = arith.constant 5.000000e-01 : f32
    %22 = vector.broadcast %cst_26 : f32 to vector<30x32xf32>
    %23 = arith.mulf %22, %21 : vector<30x32xf32>
    %c0_27 = arith.constant 0 : index
    %c1_28 = arith.constant 1 : index
    %c0_29 = arith.constant 0 : index
    %24 = vector.load %arg9[%c0_27, %c1_28, %c0_29] : memref<1x32x32xf32, #tpu.memory_space<vmem>>, vector<1x30x32xf32>
    %25 = vector.shape_cast %24 : vector<1x30x32xf32> to vector<30x32xf32>
    %26 = vector.shape_cast %23 : vector<30x32xf32> to vector<1x30x32xf32>
    tpu.vector_store %arg9[%c0_27, %c1_28, %c0_29], %26 {strides = array<i32>} : memref<1x32x32xf32, #tpu.memory_space<vmem>>, vector<1x30x32xf32>,
    %c0_30 = arith.constant 0 : index
    %c0_31 = arith.constant 0 : index
    %c0_32 = arith.constant 0 : index
    %27 = vector.load %arg9[%c0_30, %c0_31, %c0_32] : memref<1x32x32xf32, #tpu.memory_space<vmem>>, vector<1x25x32xf32>
    %28 = vector.shape_cast %27 : vector<1x25x32xf32> to vector<25x32xf32>
    %c0_33 = arith.constant 0 : index
    %c1_34 = arith.constant 1 : index
    %c0_35 = arith.constant 0 : index
    %29 = vector.load %arg9[%c0_33, %c1_34, %c0_35] : memref<1x32x32xf32, #tpu.memory_space<vmem>>, vector<1x25x32xf32>
    %30 = vector.shape_cast %29 : vector<1x25x32xf32> to vector<25x32xf32>
    %c0_36 = arith.constant 0 : index
    %c2 = arith.constant 2 : index
    %c0_37 = arith.constant 0 : index
    %31 = vector.load %arg9[%c0_36, %c2, %c0_37] : memref<1x32x32xf32, #tpu.memory_space<vmem>>, vector<1x25x32xf32>
    %32 = vector.shape_cast %31 : vector<1x25x32xf32> to vector<25x32xf32>
    %c0_38 = arith.constant 0 : index
    %c3 = arith.constant 3 : index
    %c0_39 = arith.constant 0 : index
    %33 = vector.load %arg9[%c0_38, %c3, %c0_39] : memref<1x32x32xf32, #tpu.memory_space<vmem>>, vector<1x25x32xf32>
    %34 = vector.shape_cast %33 : vector<1x25x32xf32> to vector<25x32xf32>
    %35 = tpu.concatenate %28, %30, %32, %34 in 1 : vector<25x32xf32>, vector<25x32xf32>, vector<25x32xf32>, vector<25x32xf32> -> vector<25x128xf32>
    %c0_40 = arith.constant 0 : index
    %c0_41 = arith.constant 0 : index
    %36 = vector.load %arg11[%c0_40, %c0_41] : memref<32x256xf32, #tpu.memory_space<vmem>>, vector<25x128xf32>
    tpu.vector_store %arg11[%c0_40, %c0_41], %35 {strides = array<i32>} : memref<32x256xf32, #tpu.memory_space<vmem>>, vector<25x128xf32>,
    %c0_42 = arith.constant 0 : index
    %c4 = arith.constant 4 : index
    %c0_43 = arith.constant 0 : index
    %37 = vector.load %arg9[%c0_42, %c4, %c0_43] : memref<1x32x32xf32, #tpu.memory_space<vmem>>, vector<1x25x32xf32>
    %38 = vector.shape_cast %37 : vector<1x25x32xf32> to vector<25x32xf32>
    %c0_44 = arith.constant 0 : index
    %c5 = arith.constant 5 : index
    %c0_45 = arith.constant 0 : index
    %39 = vector.load %arg9[%c0_44, %c5, %c0_45] : memref<1x32x32xf32, #tpu.memory_space<vmem>>, vector<1x25x32xf32>
    %40 = vector.shape_cast %39 : vector<1x25x32xf32> to vector<25x32xf32>
    %c0_46 = arith.constant 0 : index
    %c6 = arith.constant 6 : index
    %c0_47 = arith.constant 0 : index
    %41 = vector.load %arg9[%c0_46, %c6, %c0_47] : memref<1x32x32xf32, #tpu.memory_space<vmem>>, vector<1x25x32xf32>
    %42 = vector.shape_cast %41 : vector<1x25x32xf32> to vector<25x32xf32>
    %c0_48 = arith.constant 0 : index
    %c7 = arith.constant 7 : index
    %c0_49 = arith.constant 0 : index
    %43 = vector.load %arg9[%c0_48, %c7, %c0_49] : memref<1x32x32xf32, #tpu.memory_space<vmem>>, vector<1x25x32xf32>
    %44 = vector.shape_cast %43 : vector<1x25x32xf32> to vector<25x32xf32>
    %45 = tpu.concatenate %38, %40, %42, %44 in 1 : vector<25x32xf32>, vector<25x32xf32>, vector<25x32xf32>, vector<25x32xf32> -> vector<25x128xf32>
    %c0_50 = arith.constant 0 : index
    %c128 = arith.constant 128 : index
    %46 = vector.load %arg11[%c0_50, %c128] : memref<32x256xf32, #tpu.memory_space<vmem>>, vector<25x128xf32>
    tpu.vector_store %arg11[%c0_50, %c128], %45 {strides = array<i32>} : memref<32x256xf32, #tpu.memory_space<vmem>>, vector<25x128xf32>,
    %c0_51 = arith.constant 0 : index
    %c0_52 = arith.constant 0 : index
    %47 = vector.load %arg11[%c0_51, %c0_52] : memref<32x256xf32, #tpu.memory_space<vmem>>, vector<32x256xf32>
    %c0_53 = arith.constant 0 : index
    %c0_54 = arith.constant 0 : index
    %48 = vector.load %arg4[%c0_53, %c0_54] : memref<256x64xf32, #tpu.memory_space<vmem>>, vector<256x64xf32>
    %cst_55 = arith.constant dense<0.000000e+00> : vector<32x64xf32>
    %49 = tpu.matmul %47, %48, %cst_55 {dimension_numbers = #tpu.dot_dimension_numbers<[1], [0], [0], [1], [0, 0, 1, 1], [], []>} : vector<32x256xf32>, vector<256x64xf32>, vector<32x64xf32> -> vector<32x64xf32>
    %c0_56 = arith.constant 0 : index
    %c0_57 = arith.constant 0 : index
    %50 = vector.load %arg5[%c0_56, %c0_57] : memref<1x64xf32, #tpu.memory_space<vmem>>, vector<1x64xf32>
    %51 = vector.broadcast %50 : vector<1x64xf32> to vector<32x64xf32>
    %52 = arith.addf %49, %51 : vector<32x64xf32>
    %cst_58 = arith.constant 0.000000e+00 : f32
    %53 = vector.broadcast %cst_58 : f32 to vector<32x64xf32>
    %54 = arith.maximumf %52, %53 : vector<32x64xf32>
    %c0_59 = arith.constant 0 : index
    %c0_60 = arith.constant 0 : index
    %55 = vector.load %arg14[%c0_59, %c0_60] : memref<32x64xf32, #tpu.memory_space<vmem>>, vector<32x64xf32>
    tpu.vector_store %arg14[%c0_59, %c0_60], %54 {strides = array<i32>} : memref<32x64xf32, #tpu.memory_space<vmem>>, vector<32x64xf32>,
    %56 = vector.extract_strided_slice %54 {offsets = [23, 0], sizes = [1, 64], strides = [1, 1]} : vector<32x64xf32> to vector<1x64xf32>
    %c25_61 = arith.constant 25 : index
    %c0_62 = arith.constant 0 : index
    %57 = vector.load %arg14[%c25_61, %c0_62] : memref<32x64xf32, #tpu.memory_space<vmem>>, vector<1x64xf32>
    tpu.vector_store %arg14[%c25_61, %c0_62], %56 {strides = array<i32>} : memref<32x64xf32, #tpu.memory_space<vmem>>, vector<1x64xf32>,
    %c0_63 = arith.constant 0 : index
    %c0_64 = arith.constant 0 : index
    %58 = tpu.strided_load %arg14[%c0_63, %c0_64] {strides = array<i32: 2, 1>} : memref<32x64xf32, #tpu.memory_space<vmem>>, vector<13x64xf32>
    %c1_65 = arith.constant 1 : index
    %c0_66 = arith.constant 0 : index
    %59 = tpu.strided_load %arg14[%c1_65, %c0_66] {strides = array<i32: 2, 1>} : memref<32x64xf32, #tpu.memory_space<vmem>>, vector<13x64xf32>
    %60 = arith.addf %58, %59 : vector<13x64xf32>
    %cst_67 = arith.constant 5.000000e-01 : f32
    %61 = vector.broadcast %cst_67 : f32 to vector<13x64xf32>
    %62 = arith.mulf %61, %60 : vector<13x64xf32>
    %c0_68 = arith.constant 0 : index
    %c1_69 = arith.constant 1 : index
    %c0_70 = arith.constant 0 : index
    %63 = vector.load %arg10[%c0_68, %c1_69, %c0_70] : memref<1x15x64xf32, #tpu.memory_space<vmem>>, vector<1x13x64xf32>
    %64 = vector.shape_cast %63 : vector<1x13x64xf32> to vector<13x64xf32>
    %65 = vector.shape_cast %62 : vector<13x64xf32> to vector<1x13x64xf32>
    tpu.vector_store %arg10[%c0_68, %c1_69, %c0_70], %65 {strides = array<i32>} : memref<1x15x64xf32, #tpu.memory_space<vmem>>, vector<1x13x64xf32>,
    %c0_71 = arith.constant 0 : index
    %c0_72 = arith.constant 0 : index
    %c0_73 = arith.constant 0 : index
    %66 = vector.load %arg10[%c0_71, %c0_72, %c0_73] : memref<1x15x64xf32, #tpu.memory_space<vmem>>, vector<1x8x64xf32>
    %67 = vector.shape_cast %66 : vector<1x8x64xf32> to vector<8x64xf32>
    %c0_74 = arith.constant 0 : index
    %c1_75 = arith.constant 1 : index
    %c0_76 = arith.constant 0 : index
    %68 = vector.load %arg10[%c0_74, %c1_75, %c0_76] : memref<1x15x64xf32, #tpu.memory_space<vmem>>, vector<1x8x64xf32>
    %69 = vector.shape_cast %68 : vector<1x8x64xf32> to vector<8x64xf32>
    %70 = tpu.concatenate %67, %69 in 1 : vector<8x64xf32>, vector<8x64xf32> -> vector<8x128xf32>
    %c0_77 = arith.constant 0 : index
    %c0_78 = arith.constant 0 : index
    %71 = vector.load %arg12[%c0_77, %c0_78] : memref<8x512xf32, #tpu.memory_space<vmem>>, vector<8x128xf32>
    tpu.vector_store %arg12[%c0_77, %c0_78], %70 {strides = array<i32>} : memref<8x512xf32, #tpu.memory_space<vmem>>, vector<8x128xf32>,
    %c0_79 = arith.constant 0 : index
    %c2_80 = arith.constant 2 : index
    %c0_81 = arith.constant 0 : index
    %72 = vector.load %arg10[%c0_79, %c2_80, %c0_81] : memref<1x15x64xf32, #tpu.memory_space<vmem>>, vector<1x8x64xf32>
    %73 = vector.shape_cast %72 : vector<1x8x64xf32> to vector<8x64xf32>
    %c0_82 = arith.constant 0 : index
    %c3_83 = arith.constant 3 : index
    %c0_84 = arith.constant 0 : index
    %74 = vector.load %arg10[%c0_82, %c3_83, %c0_84] : memref<1x15x64xf32, #tpu.memory_space<vmem>>, vector<1x8x64xf32>
    %75 = vector.shape_cast %74 : vector<1x8x64xf32> to vector<8x64xf32>
    %76 = tpu.concatenate %73, %75 in 1 : vector<8x64xf32>, vector<8x64xf32> -> vector<8x128xf32>
    %c0_85 = arith.constant 0 : index
    %c128_86 = arith.constant 128 : index
    %77 = vector.load %arg12[%c0_85, %c128_86] : memref<8x512xf32, #tpu.memory_space<vmem>>, vector<8x128xf32>
    tpu.vector_store %arg12[%c0_85, %c128_86], %76 {strides = array<i32>} : memref<8x512xf32, #tpu.memory_space<vmem>>, vector<8x128xf32>,
    %c0_87 = arith.constant 0 : index
    %c4_88 = arith.constant 4 : index
    %c0_89 = arith.constant 0 : index
    %78 = vector.load %arg10[%c0_87, %c4_88, %c0_89] : memref<1x15x64xf32, #tpu.memory_space<vmem>>, vector<1x8x64xf32>
    %79 = vector.shape_cast %78 : vector<1x8x64xf32> to vector<8x64xf32>
    %c0_90 = arith.constant 0 : index
    %c5_91 = arith.constant 5 : index
    %c0_92 = arith.constant 0 : index
    %80 = vector.load %arg10[%c0_90, %c5_91, %c0_92] : memref<1x15x64xf32, #tpu.memory_space<vmem>>, vector<1x8x64xf32>
    %81 = vector.shape_cast %80 : vector<1x8x64xf32> to vector<8x64xf32>
    %82 = tpu.concatenate %79, %81 in 1 : vector<8x64xf32>, vector<8x64xf32> -> vector<8x128xf32>
    %c0_93 = arith.constant 0 : index
    %c256 = arith.constant 256 : index
    %83 = vector.load %arg12[%c0_93, %c256] : memref<8x512xf32, #tpu.memory_space<vmem>>, vector<8x128xf32>
    tpu.vector_store %arg12[%c0_93, %c256], %82 {strides = array<i32>} : memref<8x512xf32, #tpu.memory_space<vmem>>, vector<8x128xf32>,
    %c0_94 = arith.constant 0 : index
    %c6_95 = arith.constant 6 : index
    %c0_96 = arith.constant 0 : index
    %84 = vector.load %arg10[%c0_94, %c6_95, %c0_96] : memref<1x15x64xf32, #tpu.memory_space<vmem>>, vector<1x8x64xf32>
    %85 = vector.shape_cast %84 : vector<1x8x64xf32> to vector<8x64xf32>
    %c0_97 = arith.constant 0 : index
    %c7_98 = arith.constant 7 : index
    %c0_99 = arith.constant 0 : index
    %86 = vector.load %arg10[%c0_97, %c7_98, %c0_99] : memref<1x15x64xf32, #tpu.memory_space<vmem>>, vector<1x8x64xf32>
    %87 = vector.shape_cast %86 : vector<1x8x64xf32> to vector<8x64xf32>
    %88 = tpu.concatenate %85, %87 in 1 : vector<8x64xf32>, vector<8x64xf32> -> vector<8x128xf32>
    %c0_100 = arith.constant 0 : index
    %c384 = arith.constant 384 : index
    %89 = vector.load %arg12[%c0_100, %c384] : memref<8x512xf32, #tpu.memory_space<vmem>>, vector<8x128xf32>
    tpu.vector_store %arg12[%c0_100, %c384], %88 {strides = array<i32>} : memref<8x512xf32, #tpu.memory_space<vmem>>, vector<8x128xf32>,
    %c0_101 = arith.constant 0 : index
    %c0_102 = arith.constant 0 : index
    %90 = vector.load %arg12[%c0_101, %c0_102] : memref<8x512xf32, #tpu.memory_space<vmem>>, vector<8x512xf32>
    %c0_103 = arith.constant 0 : index
    %c0_104 = arith.constant 0 : index
    %91 = vector.load %arg6[%c0_103, %c0_104] : memref<512x128xf32, #tpu.memory_space<vmem>>, vector<512x128xf32>
    %cst_105 = arith.constant dense<0.000000e+00> : vector<8x128xf32>
    %92 = tpu.matmul %90, %91, %cst_105 {dimension_numbers = #tpu.dot_dimension_numbers<[1], [0], [0], [1], [0, 0, 1, 1], [], []>} : vector<8x512xf32>, vector<512x128xf32>, vector<8x128xf32> -> vector<8x128xf32>
    %c0_106 = arith.constant 0 : index
    %c0_107 = arith.constant 0 : index
    %93 = vector.load %arg7[%c0_106, %c0_107] : memref<1x128xf32, #tpu.memory_space<vmem>>, vector<1x128xf32>
    %94 = vector.broadcast %93 : vector<1x128xf32> to vector<8x128xf32>
    %95 = arith.addf %92, %94 : vector<8x128xf32>
    %cst_108 = arith.constant 0.000000e+00 : f32
    %96 = vector.broadcast %cst_108 : f32 to vector<8x128xf32>
    %97 = arith.maximumf %95, %96 : vector<8x128xf32>
    %c0_109 = arith.constant 0 : index
    %c0_110 = arith.constant 0 : index
    %98 = vector.load %arg15[%c0_109, %c0_110] : memref<8x128xf32, #tpu.memory_space<vmem>>, vector<8x128xf32>
    tpu.vector_store %arg15[%c0_109, %c0_110], %97 {strides = array<i32>} : memref<8x128xf32, #tpu.memory_space<vmem>>, vector<8x128xf32>,
    %c0_111 = arith.constant 0 : index
    %c0_112 = arith.constant 0 : index
    %99 = tpu.strided_load %arg15[%c0_111, %c0_112] {strides = array<i32: 2, 1>} : memref<8x128xf32, #tpu.memory_space<vmem>>, vector<4x128xf32>
    %c1_113 = arith.constant 1 : index
    %c0_114 = arith.constant 0 : index
    %100 = tpu.strided_load %arg15[%c1_113, %c0_114] {strides = array<i32: 2, 1>} : memref<8x128xf32, #tpu.memory_space<vmem>>, vector<4x128xf32>
    %101 = arith.addf %99, %100 : vector<4x128xf32>
    %cst_115 = arith.constant 5.000000e-01 : f32
    %102 = vector.broadcast %cst_115 : f32 to vector<4x128xf32>
    %103 = arith.mulf %102, %101 : vector<4x128xf32>
    %c0_116 = arith.constant 0 : index
    %c0_117 = arith.constant 0 : index
    %c0_118 = arith.constant 0 : index
    %104 = vector.load %arg8[%c0_116, %c0_117, %c0_118] : memref<1x4x128xf32, #tpu.memory_space<vmem>>, vector<1x4x128xf32>
    %105 = vector.shape_cast %104 : vector<1x4x128xf32> to vector<4x128xf32>
    %106 = vector.shape_cast %103 : vector<4x128xf32> to vector<1x4x128xf32>
    tpu.vector_store %arg8[%c0_116, %c0_117, %c0_118], %106 {strides = array<i32>} : memref<1x4x128xf32, #tpu.memory_space<vmem>>, vector<1x4x128xf32>,
    return
  }
  func.func @transform_0(%arg0: i32) -> (i32, i32) {
    %c0_i32 = arith.constant 0 : i32
    %c0_i32_0 = arith.constant 0 : i32
    return %arg0, %c0_i32 : i32, i32
  }
  func.func @transform_1(%arg0: i32) -> (i32, i32) {
    %c0_i32 = arith.constant 0 : i32
    %c0_i32_0 = arith.constant 0 : i32
    %c0_i32_1 = arith.constant 0 : i32
    return %c0_i32, %c0_i32_0 : i32, i32
  }
  func.func @transform_2(%arg0: i32) -> (i32, i32) {
    %c0_i32 = arith.constant 0 : i32
    %c0_i32_0 = arith.constant 0 : i32
    %c0_i32_1 = arith.constant 0 : i32
    return %c0_i32, %c0_i32_0 : i32, i32
  }
  func.func @transform_3(%arg0: i32) -> (i32, i32) {
    %c0_i32 = arith.constant 0 : i32
    %c0_i32_0 = arith.constant 0 : i32
    %c0_i32_1 = arith.constant 0 : i32
    return %c0_i32, %c0_i32_0 : i32, i32
  }
  func.func @transform_4(%arg0: i32) -> (i32, i32) {
    %c0_i32 = arith.constant 0 : i32
    %c0_i32_0 = arith.constant 0 : i32
    %c0_i32_1 = arith.constant 0 : i32
    return %c0_i32, %c0_i32_0 : i32, i32
  }
  func.func @transform_5(%arg0: i32) -> (i32, i32) {
    %c0_i32 = arith.constant 0 : i32
    %c0_i32_0 = arith.constant 0 : i32
    %c0_i32_1 = arith.constant 0 : i32
    return %c0_i32, %c0_i32_0 : i32, i32
  }
  func.func @transform_6(%arg0: i32) -> (i32, i32) {
    %c0_i32 = arith.constant 0 : i32
    %c0_i32_0 = arith.constant 0 : i32
    %c0_i32_1 = arith.constant 0 : i32
    return %c0_i32, %c0_i32_0 : i32, i32
  }
  func.func @transform_7(%arg0: i32) -> (i32, i32, i32) {
    %c0_i32 = arith.constant 0 : i32
    %c0_i32_0 = arith.constant 0 : i32
    %c0_i32_1 = arith.constant 0 : i32
    return %arg0, %c0_i32, %c0_i32_0 : i32, i32, i32
  }
}

</mosaic_0001>

<llo_original>
// kernel: fcn_blur_forward.1
$region0: #{fcn_blur_forward.1}
  #allocation0 [shape = 'u32[]', space=smem, size = 0x4, offset = 0x4, fixed_abs, tag = 'smem constant byte address 0x4 - core index']
  #allocation1 [shape = 'u32[144,128]{1,0:T(1,128)}', space=vmem, size = 0x12000, scoped, tag = 'internal scratch']
  #allocation2 [shape = 'f32[1,32,32]{2,1,0:T(8,128)}', space=vmem, size = 0x4000, scoped, tag = 'scratch operand']
  #allocation3 [shape = 'f32[1,15,64]{2,1,0:T(8,128)}', space=vmem, size = 0x2000, scoped, tag = 'scratch operand']
  #allocation4 [shape = 'f32[32,256]{1,0:T(8,128)}', space=vmem, size = 0x8000, scoped, tag = 'scratch operand']
  #allocation5 [shape = 'f32[8,512]{1,0:T(8,128)}', space=vmem, size = 0x4000, scoped, tag = 'scratch operand']
  #allocation6 [shape = 'f32[64,32]{1,0:T(8,128)}', space=vmem, size = 0x8000, scoped, tag = 'scratch operand']
  #allocation7 [shape = 'f32[32,64]{1,0:T(8,128)}', space=vmem, size = 0x4000, scoped, tag = 'scratch operand']
  #allocation8 [shape = 'f32[8,128]{1,0:T(8,128)}', space=vmem, size = 0x1000, scoped, tag = 'scratch operand']
  %s0 = inlined_call_operand.vmem [shape: f32[128,32], index: 0, kind: input, shape index: {}]
  %s1 = inlined_call_operand.vmem [shape: f32[32,32], index: 1, kind: input, shape index: {}]
  %s2 = inlined_call_operand.vmem [shape: f32[1,32], index: 2, kind: input, shape index: {}]
  %s3 = inlined_call_operand.vmem [shape: f32[256,64], index: 3, kind: input, shape index: {}]
  %s4 = inlined_call_operand.vmem [shape: f32[1,64], index: 4, kind: input, shape index: {}]
  %s5 = inlined_call_operand.vmem [shape: f32[512,128], index: 5, kind: input, shape index: {}]
  %s6 = inlined_call_operand.vmem [shape: f32[1,128], index: 6, kind: input, shape index: {}]
  %s7 = inlined_call_operand.hbm [shape: f32[2,4,128], index: 7, kind: output, shape index: {}]
  %s8 = sld [smem:[#allocation0]]
  $region61: #{fcn_blur_forward.1} parent=0
    _
  %s10 = ssub.s32 1, %s8
  %s11 = scalar_select 0, %s10, %s8
  $region1: #{fcn_blur_forward.1} parent=0
    #allocation9 [shape = 'u8[4096]{0}', space=vmem, size = 0x1000, scoped, tag = 'output window, operand 0']
    #allocation10 [shape = 's32[2]{0}', space=sflag, size = 0x8, scoped, tag = 'scoped memory for fcn_blur_forward.1']
    %12 = vsyncpa [#allocation10], 0
    %s13 = scalar_lea.sflag [#allocation10], 1
    %14 = vsyncpa %s13, 0
    loop: start=0, step=1, limit=4
    $region2: #{fcn_blur_forward.1} parent=1 // loop_pre_header
      _
    $region3: #{fcn_blur_forward.1} parent=1 // loop_header
      %s16 = sphi 0, %s20
      %p17 = scmp.ge.s32.totalorder %s16, 4
      %s26 = sphi 0, %s28
      %s29 = sphi 0, %s26
      %s30 = sphi 0, %s29
      %s46 = sphi 0, %s30
      %s50 = sphi 0, %s50
      %s52 = sphi 0, %s50
      %s53 = sphi 0, %s52
      %s67 = sphi 0, %s53
      %s71 = sphi 0, %s71
      %s73 = sphi 0, %s71
      %s74 = sphi 0, %s73
      %s88 = sphi 0, %s74
      %s92 = sphi 0, %s92
      %s94 = sphi 0, %s92
      %s95 = sphi 0, %s94
      %s109 = sphi 0, %s95
      %s113 = sphi 0, %s113
      %s115 = sphi 0, %s113
      %s116 = sphi 0, %s115
      %s130 = sphi 0, %s116
      %s134 = sphi 0, %s134
      %s136 = sphi 0, %s134
      %s137 = sphi 0, %s136
      %s151 = sphi 0, %s137
      %s155 = sphi 0, %s155
      %s157 = sphi 0, %s155
      %s158 = sphi 0, %s157
      %s172 = sphi 0, %s158
      %s178 = sphi 0, %s180
      %s181 = sphi 0, %s178
      %s182 = sphi 0, %s181
      %s198 = sphi 0, %s182
    $region4: #{fcn_blur_forward.1} parent=1 // loop_header_branch
      %19 = sbr.rel (%p17) target = $region8
    $region5: #{fcn_blur_forward.1} parent=1 // loop_body
      %s21 = ssub.s32 %s16, 1
      %s22 = ssub.s32 %s16, 2
      %s23 = sadd.s32 %s16, 1
      %s24 = ssub.s32 %s16, %s23
      %p25 = scmp.eq.s32.totalorder %s24, 0
      %s27 = sadd.s32 %s26, 1
      %s28 = scalar_select %p25, %s26, %s27
      %p31 = pneg %p25
      %p32 = scmp.eq.s32.totalorder %s16, 1
      %p33 = por %p31, %p32
      %p34 = scmp.ne.s32.totalorder %s26, %s29
      %p35 = scmp.eq.s32.totalorder %s16, 0
      %p36 = por %p34, %p35
      %p37 = scmp.ne.s32.totalorder %s26, %s29
      %p38 = scmp.eq.s32.totalorder %s21, 1
      %p39 = por %p37, %p38
      %p40 = scmp.ne.s32.totalorder %s29, %s30
      %p41 = scmp.eq.s32.totalorder %s21, 0
      %p42 = por %p40, %p41
      %p43 = scmp.ne.s32.totalorder %s29, %s30
      %p44 = scmp.eq.s32.totalorder %s22, 1
      %p45 = por %p43, %p44
      %p47 = scmp.ne.s32.totalorder %s30, %s46
      %p48 = scmp.eq.s32.totalorder %s22, 0
      %p49 = por %p47, %p48
      %s51 = sadd.s32 %s50, 1
      %p54 = scmp.eq.s32.totalorder %s16, 1
      %p55 = scmp.ne.s32.totalorder %s50, %s52
      %p56 = scmp.eq.s32.totalorder %s16, 0
      %p57 = por %p55, %p56
      %p58 = scmp.ne.s32.totalorder %s50, %s52
      %p59 = scmp.eq.s32.totalorder %s21, 1
      %p60 = por %p58, %p59
      %p61 = scmp.ne.s32.totalorder %s52, %s53
      %p62 = scmp.eq.s32.totalorder %s21, 0
      %p63 = por %p61, %p62
      %p64 = scmp.ne.s32.totalorder %s52, %s53
      %p65 = scmp.eq.s32.totalorder %s22, 1
      %p66 = por %p64, %p65
      %p68 = scmp.ne.s32.totalorder %s53, %s67
      %p69 = scmp.eq.s32.totalorder %s22, 0
      %p70 = por %p68, %p69
      %s72 = sadd.s32 %s71, 1
      %p75 = scmp.eq.s32.totalorder %s16, 1
      %p76 = scmp.ne.s32.totalorder %s71, %s73
      %p77 = scmp.eq.s32.totalorder %s16, 0
      %p78 = por %p76, %p77
      %p79 = scmp.ne.s32.totalorder %s71, %s73
      %p80 = scmp.eq.s32.totalorder %s21, 1
      %p81 = por %p79, %p80
      %p82 = scmp.ne.s32.totalorder %s73, %s74
      %p83 = scmp.eq.s32.totalorder %s21, 0
      %p84 = por %p82, %p83
      %p85 = scmp.ne.s32.totalorder %s73, %s74
      %p86 = scmp.eq.s32.totalorder %s22, 1
      %p87 = por %p85, %p86
      %p89 = scmp.ne.s32.totalorder %s74, %s88
      %p90 = scmp.eq.s32.totalorder %s22, 0
      %p91 = por %p89, %p90
      %s93 = sadd.s32 %s92, 1
      %p96 = scmp.eq.s32.totalorder %s16, 1
      %p97 = scmp.ne.s32.totalorder %s92, %s94
      %p98 = scmp.eq.s32.totalorder %s16, 0
      %p99 = por %p97, %p98
      %p100 = scmp.ne.s32.totalorder %s92, %s94
      %p101 = scmp.eq.s32.totalorder %s21, 1
      %p102 = por %p100, %p101
      %p103 = scmp.ne.s32.totalorder %s94, %s95
      %p104 = scmp.eq.s32.totalorder %s21, 0
      %p105 = por %p103, %p104
      %p106 = scmp.ne.s32.totalorder %s94, %s95
      %p107 = scmp.eq.s32.totalorder %s22, 1
      %p108 = por %p106, %p107
      %p110 = scmp.ne.s32.totalorder %s95, %s109
      %p111 = scmp.eq.s32.totalorder %s22, 0
      %p112 = por %p110, %p111
      %s114 = sadd.s32 %s113, 1
      %p117 = scmp.eq.s32.totalorder %s16, 1
      %p118 = scmp.ne.s32.totalorder %s113, %s115
      %p119 = scmp.eq.s32.totalorder %s16, 0
      %p120 = por %p118, %p119
      %p121 = scmp.ne.s32.totalorder %s113, %s115
      %p122 = scmp.eq.s32.totalorder %s21, 1
      %p123 = por %p121, %p122
      %p124 = scmp.ne.s32.totalorder %s115, %s116
      %p125 = scmp.eq.s32.totalorder %s21, 0
      %p126 = por %p124, %p125
      %p127 = scmp.ne.s32.totalorder %s115, %s116
      %p128 = scmp.eq.s32.totalorder %s22, 1
      %p129 = por %p127, %p128
      %p131 = scmp.ne.s32.totalorder %s116, %s130
      %p132 = scmp.eq.s32.totalorder %s22, 0
      %p133 = por %p131, %p132
      %s135 = sadd.s32 %s134, 1
      %p138 = scmp.eq.s32.totalorder %s16, 1
      %p139 = scmp.ne.s32.totalorder %s134, %s136
      %p140 = scmp.eq.s32.totalorder %s16, 0
      %p141 = por %p139, %p140
      %p142 = scmp.ne.s32.totalorder %s134, %s136
      %p143 = scmp.eq.s32.totalorder %s21, 1
      %p144 = por %p142, %p143
      %p145 = scmp.ne.s32.totalorder %s136, %s137
      %p146 = scmp.eq.s32.totalorder %s21, 0
      %p147 = por %p145, %p146
      %p148 = scmp.ne.s32.totalorder %s136, %s137
      %p149 = scmp.eq.s32.totalorder %s22, 1
      %p150 = por %p148, %p149
      %p152 = scmp.ne.s32.totalorder %s137, %s151
      %p153 = scmp.eq.s32.totalorder %s22, 0
      %p154 = por %p152, %p153
      %s156 = sadd.s32 %s155, 1
      %p159 = scmp.eq.s32.totalorder %s16, 1
      %p160 = scmp.ne.s32.totalorder %s155, %s157
      %p161 = scmp.eq.s32.totalorder %s16, 0
      %p162 = por %p160, %p161
      %p163 = scmp.ne.s32.totalorder %s155, %s157
      %p164 = scmp.eq.s32.totalorder %s21, 1
      %p165 = por %p163, %p164
      %p166 = scmp.ne.s32.totalorder %s157, %s158
      %p167 = scmp.eq.s32.totalorder %s21, 0
      %p168 = por %p166, %p167
      %p169 = scmp.ne.s32.totalorder %s157, %s158
      %p170 = scmp.eq.s32.totalorder %s22, 1
      %p171 = por %p169, %p170
      %p173 = scmp.ne.s32.totalorder %s158, %s172
      %p174 = scmp.eq.s32.totalorder %s22, 0
      %p175 = por %p173, %p174
      %s176 = ssub.s32 %s16, %s23
      %p177 = scmp.eq.s32.totalorder %s176, 0
      %s179 = sadd.s32 %s178, 1
      %s180 = scalar_select %p177, %s178, %s179
      %p183 = pneg %p177
      %p184 = scmp.eq.s32.totalorder %s16, 1
      %p185 = por %p183, %p184
      %p186 = scmp.ne.s32.totalorder %s178, %s181
      %p187 = scmp.eq.s32.totalorder %s16, 0
      %p188 = por %p186, %p187
      %p189 = scmp.ne.s32.totalorder %s178, %s181
      %p190 = scmp.eq.s32.totalorder %s21, 1
      %p191 = por %p189, %p190
      %p192 = scmp.ne.s32.totalorder %s181, %s182
      %p193 = scmp.eq.s32.totalorder %s21, 0
      %p194 = por %p192, %p193
      %p195 = scmp.ne.s32.totalorder %s181, %s182
      %p196 = scmp.eq.s32.totalorder %s22, 1
      %p197 = por %p195, %p196
      %p199 = scmp.ne.s32.totalorder %s182, %s198
      %p200 = scmp.eq.s32.totalorder %s22, 0
      %p201 = por %p199, %p200
      %p202 = scmp.le.s32.totalorder 1, %s16
      %p203 = scmp.lt.s32.totalorder %s16, 3
      %p204 = pnand %p202, %p203
      %p205 = pneg %p204
      // Predicated region
      $region9: #{fcn_blur_forward.1} parent=5 // pred_check
        _
      $region10: #{fcn_blur_forward.1} parent=5 // pred_check_branch
        %207 = sbr.rel (%p204) target = $region12
      $region11: #{fcn_blur_forward.1} parent=5 // pred_region
        %s208 = ssub.s32 %s16, 1
        // Predicated region
        $region13: #{fcn_blur_forward.1} parent=11 // pred_check
          %p209 = pneg %p63
        $region14: #{fcn_blur_forward.1} parent=11 // pred_check_branch
          %211 = sbr.rel (%p209) target = $region16
        $region15: #{fcn_blur_forward.1} parent=11 // pred_region
          _
        $region16: #{fcn_blur_forward.1} parent=11 // pred_fallthru
          _
        // Predicated region
        $region17: #{fcn_blur_forward.1} parent=11 // pred_check
          %p212 = pneg %p84
        $region18: #{fcn_blur_forward.1} parent=11 // pred_check_branch
          %214 = sbr.rel (%p212) target = $region20
        $region19: #{fcn_blur_forward.1} parent=11 // pred_region
          _
        $region20: #{fcn_blur_forward.1} parent=11 // pred_fallthru
          _
        // Predicated region
        $region21: #{fcn_blur_forward.1} parent=11 // pred_check
          %p215 = pneg %p105
        $region22: #{fcn_blur_forward.1} parent=11 // pred_check_branch
          %217 = sbr.rel (%p215) target = $region24
        $region23: #{fcn_blur_forward.1} parent=11 // pred_region
          _
        $region24: #{fcn_blur_forward.1} parent=11 // pred_fallthru
          _
        // Predicated region
        $region25: #{fcn_blur_forward.1} parent=11 // pred_check
          %p218 = pneg %p126
        $region26: #{fcn_blur_forward.1} parent=11 // pred_check_branch
          %220 = sbr.rel (%p218) target = $region28
        $region27: #{fcn_blur_forward.1} parent=11 // pred_region
          _
        $region28: #{fcn_blur_forward.1} parent=11 // pred_fallthru
          _
        // Predicated region
        $region29: #{fcn_blur_forward.1} parent=11 // pred_check
          %p221 = pneg %p147
        $region30: #{fcn_blur_forward.1} parent=11 // pred_check_branch
          %223 = sbr.rel (%p221) target = $region32
        $region31: #{fcn_blur_forward.1} parent=11 // pred_region
          _
        $region32: #{fcn_blur_forward.1} parent=11 // pred_fallthru
          _
        // Predicated region
        $region33: #{fcn_blur_forward.1} parent=11 // pred_check
          %p224 = pneg %p168
        $region34: #{fcn_blur_forward.1} parent=11 // pred_check_branch
          %226 = sbr.rel (%p224) target = $region36
        $region35: #{fcn_blur_forward.1} parent=11 // pred_region
          _
        $region36: #{fcn_blur_forward.1} parent=11 // pred_fallthru
          _
      $region12: #{fcn_blur_forward.1} parent=5 // pred_fallthru
        _
      %p227 = scmp.lt.s32.totalorder %s16, 2
      // Predicated region
      $region37: #{fcn_blur_forward.1} parent=5 // pred_check
        %p228 = pneg %p227
      $region38: #{fcn_blur_forward.1} parent=5 // pred_check_branch
        %230 = sbr.rel (%p228) target = $region40
      $region39: #{fcn_blur_forward.1} parent=5 // pred_region
        // Predicated region
        $region41: #{fcn_blur_forward.1} parent=39 // pred_check
          %p231 = pneg %p36
        $region42: #{fcn_blur_forward.1} parent=39 // pred_check_branch
          %233 = sbr.rel (%p231) target = $region44
        $region43: #{fcn_blur_forward.1} parent=39 // pred_region
          %s234 = smul.u32 8, %s16
          %p235 = scmp.lt.s32.totalorder %s234, 15
          %s236 = scalar_select %p235, %s234, 15
          %s237 = smul.addr %s236, 8
          %s238 = scalar_lea.vmem %s0, %s237
          %s239 = smul.u32 8, %s16
        $region44: #{fcn_blur_forward.1} parent=39 // pred_fallthru
          _
      $region40: #{fcn_blur_forward.1} parent=5 // pred_fallthru
        _
      %p240 = scmp.le.s32.totalorder 1, %s16
      %p241 = scmp.lt.s32.totalorder %s16, 3
      %p242 = pnand %p240, %p241
      %p243 = pneg %p242
      // Predicated region
      $region45: #{fcn_blur_forward.1} parent=5 // pred_check
        _
      $region46: #{fcn_blur_forward.1} parent=5 // pred_check_branch
        %245 = sbr.rel (%p242) target = $region48
      $region47: #{fcn_blur_forward.1} parent=5 // pred_region
        %s246 = ssub.s32 %s16, 1
        %s247 = smul.u32 8, %s21
        %p248 = scmp.lt.s32.totalorder %s247, 15
        %s249 = scalar_select %p248, %s247, 15
        %s250 = smul.addr %s249, 8
        %s251 = scalar_lea.vmem %s0, %s250
        %p252 = pneg %p42
        %p253 = pneg %p39
        %p254 = pneg %p63
        %p255 = pneg %p60
        %p256 = pneg %p84
        %p257 = pneg %p81
        %p258 = pneg %p105
        %p259 = pneg %p102
        %p260 = pneg %p126
        %p261 = pneg %p123
        %p262 = pneg %p147
        %p263 = pneg %p144
        %p264 = pneg %p168
        %p265 = pneg %p165
        %p266 = pneg %p194
        %p267 = pneg %p191
        %s268 = sand.u32 %s181, 1
        %s269 = scalar_lea.sflag [#allocation10], %s268
        %s270 = sand.u32 %s181, 1
        %s271 = smul.addr %s270, 4
        %s272 = scalar_lea.vmem [#allocation9], %s271
        %s273 = smul.u32 8, %s21
        %p274 = scmp.lt.s32.totalorder %s273, 15
        %s275 = scalar_select %p274, %s273, 15
        %s276 = smul.addr %s275, 8
        %s277 = scalar_lea.vmem %s0, %s276
        %s278 = smul.u32 8, %s21
        %vm279 = vcmask 253952
        %280 = vst.msk [vmem:[#allocation2] sm:$0x1] %vm279, 0.0
        %281 = vst.msk [vmem:[#allocation2 + $0x1f] sm:$0x1] %vm279, 0.0
        %282 = vst [vmem:[#allocation4 + $0x30] sm:$0xfe] 0.0
        %283 = vst [vmem:[#allocation4 + $0x38] sm:$0xfe] 0.0
        %vm284 = vcmask 516096
        %285 = vst.msk [vmem:[#allocation3] sm:$0x1] %vm284, 0.0
        %286 = vst.msk [vmem:[#allocation3 + $0xe] sm:$0x1] %vm284, 0.0
        %v287 = vld [vmem:[%s277] sm:$0xff]
        %v288 = vld [vmem:[%s277 + $0x8] sm:$0xff]
        %v289 = vld [vmem:[%s277 + $0x10] sm:$0xff]
        %v290 = vld [vmem:[%s277 + $0x18] sm:$0xff]
        %v291 = vld [vmem:[%s277 + $0x20] sm:$0xff]
        %v292 = vld [vmem:[%s277 + $0x28] sm:$0xff]
        %v293 = vld [vmem:[%s277 + $0x30] sm:$0xff]
        %v294 = vld [vmem:[%s277 + $0x38] sm:$0xff]
        %v295 = vld [vmem:[%s1] sm:$0xff]
        %v296 = vld [vmem:[%s1 + $0x8] sm:$0xff]
        %v297 = vld [vmem:[%s1 + $0x10] sm:$0xff]
        %v298 = vld [vmem:[%s1 + $0x18] sm:$0xff]
        %v299 = vld [vmem:[%s2] sm:$0x1]
        %v301 = vlaneseq
        %v302 = vshrl.u32 %v301, 7
        %v303 = vsub.s32 0, %v302
        %v304 = vrot.slane %v299, %v303
        %vm306 = vcmask 261120
        %v308 = vsel %vm306, %v287, 0
        %v311 = vsel %vm306, %v288, 0
        %v314 = vsel %vm306, %v289, 0
        %v317 = vsel %vm306, %v290, 0
        %v320 = vsel %vm306, %v291, 0
        %v323 = vsel %vm306, %v292, 0
        %v326 = vsel %vm306, %v293, 0
        %v329 = vsel %vm306, %v294, 0
        %331 = vmatprep.subr.mxu0 0.0
        %332 = vmatpush1.msra.mxu0 %v295
        %333 = vmatprep.subr.mxu0 0.0
        %334 = vmatpush1.msra.mxu0 %v296
        %335 = vmatprep.subr.mxu0 0.0
        %336 = vmatpush1.msra.mxu0 %v297
        %337 = vmatprep.subr.mxu0 0.0
        %338 = vmatpush1.msra.mxu0 %v298
        %339 = vmatprep.subr.mxu0 0.0
        %340 = vmatpush1.msra.mxu0 0.0
        %341 = vmatprep.subr.mxu0 0.0
        %342 = vmatpush1.msra.mxu0 0.0
        %343 = vmatprep.subr.mxu0 0.0
        %344 = vmatpush1.msra.mxu0 0.0
        %345 = vmatprep.subr.mxu0 0.0
        %346 = vmatpush1.msra.mxu0 0.0
        %347 = vmatprep.subr.mxu0 0.0
        %348 = vmatpush1.msra.mxu0 0.0
        %349 = vmatprep.subr.mxu0 0.0
        %350 = vmatpush1.msra.mxu0 0.0
        %351 = vmatprep.subr.mxu0 0.0
        %352 = vmatpush1.msra.mxu0 0.0
        %353 = vmatprep.subr.mxu0 0.0
        %354 = vmatpush1.msra.mxu0 0.0
        %355 = vmatprep.subr.mxu0 0.0
        %356 = vmatpush1.msra.mxu0 0.0
        %357 = vmatprep.subr.mxu0 0.0
        %358 = vmatpush1.msra.mxu0 0.0
        %359 = vmatprep.subr.mxu0 0.0
        %360 = vmatpush1.msra.mxu0 0.0
        %361 = vmatprep.subr.mxu0 0.0
        %362 = vmatpush1.msra.mxu0 0.0
        %363 = vmatprep.subr.mxu0 0.0
        %364 = vmatpush1.msra.mxu0 0.0
        %365 = vmatprep.subr.mxu0 0.0
        %366 = vmatpush1.msra.mxu0 0.0
        %367 = vmatprep.subr.mxu0 0.0
        %368 = vmatpush1.msra.mxu0 0.0
        %369 = vmatprep.subr.mxu0 0.0
        %370 = vmatpush1.msra.mxu0 0.0
        %371 = vmatprep.subr.mxu0 0.0
        %372 = vmatpush1.msra.mxu0 0.0
        %373 = vmatprep.subr.mxu0 0.0
        %374 = vmatpush1.msra.mxu0 0.0
        %375 = vmatprep.subr.mxu0 0.0
        %376 = vmatpush1.msra.mxu0 0.0
        %377 = vmatprep.subr.mxu0 0.0
        %378 = vmatpush1.msra.mxu0 0.0
        %379 = vmatprep.subr.mxu0 0.0
        %380 = vmatpush1.msra.mxu0 0.0
        %381 = vmatprep.subr.mxu0 0.0
        %382 = vmatpush1.msra.mxu0 0.0
        %383 = vmatprep.subr.mxu0 0.0
        %384 = vmatpush1.msra.mxu0 0.0
        %385 = vmatprep.subr.mxu0 0.0
        %386 = vmatpush1.msra.mxu0 0.0
        %387 = vmatprep.subr.mxu0 0.0
        %388 = vmatpush1.msra.mxu0 0.0
        %389 = vmatprep.subr.mxu0 0.0
        %390 = vmatpush1.msra.mxu0 0.0
        %391 = vmatprep.subr.mxu0 0.0
        %392 = vmatpush1.msra.mxu0 0.0
        %393 = vmatprep.subr.mxu0 0.0
        %394 = vmatpush1.msra.mxu0 0.0
        %395 = vmatprep.mubr.f32.mxu0 0.0
        %396 = vmatmul.mubr.f32.gmra.mrb[0].mxu0 %v308
        %v397 = vpop.f32.mrb[0].mxu0
        %v398 = vadd.f32 %v304, %v397
        %v399 = vpop.f32.mrb[0].mxu0
        %400 = vmatprep.mubr.f32.mxu0 0.0
        %401 = vmatmul.mubr.f32.gmra.mrb[0].mxu0 %v311
        %v402 = vpop.f32.mrb[0].mxu0
        %v403 = vadd.f32 %v304, %v402
        %v404 = vpop.f32.mrb[0].mxu0
        %405 = vmatprep.mubr.f32.mxu0 0.0
        %406 = vmatmul.mubr.f32.gmra.mrb[0].mxu0 %v314
        %v407 = vpop.f32.mrb[0].mxu0
        %v408 = vadd.f32 %v304, %v407
        %v409 = vpop.f32.mrb[0].mxu0
        %410 = vmatprep.mubr.f32.mxu0 0.0
        %411 = vmatmul.mubr.f32.gmra.mrb[0].mxu0 %v317
        %v412 = vpop.f32.mrb[0].mxu0
        %v413 = vadd.f32 %v304, %v412
        %v414 = vpop.f32.mrb[0].mxu0
        %415 = vmatprep.mubr.f32.mxu0 0.0
        %416 = vmatmul.mubr.f32.gmra.mrb[0].mxu0 %v320
        %v417 = vpop.f32.mrb[0].mxu0
        %v418 = vadd.f32 %v304, %v417
        %v419 = vpop.f32.mrb[0].mxu0
        %420 = vmatprep.mubr.f32.mxu0 0.0
        %421 = vmatmul.mubr.f32.gmra.mrb[0].mxu0 %v323
        %v422 = vpop.f32.mrb[0].mxu0
        %v423 = vadd.f32 %v304, %v422
        %v424 = vpop.f32.mrb[0].mxu0
        %425 = vmatprep.mubr.f32.mxu0 0.0
        %426 = vmatmul.mubr.f32.gmra.mrb[0].mxu0 %v326
        %v427 = vpop.f32.mrb[0].mxu0
        %v428 = vadd.f32 %v304, %v427
        %v429 = vpop.f32.mrb[0].mxu0
        %430 = vmatprep.mubr.f32.mxu0 0.0
        %431 = vmatmul.mubr.f32.gmra.mrb[0].mxu0 %v329
        %v432 = vpop.f32.mrb[0].mxu0
        %v433 = vadd.f32 %v304, %v432
        %v434 = vpop.f32.mrb[0].mxu0
        %435 = vdwg.mxu0
        %v436 = vmax.f32 %v398, 0.0
        %v437 = vmax.f32 %v403, 0.0
        %v438 = vmax.f32 %v408, 0.0
        %v439 = vmax.f32 %v413, 0.0
        %v440 = vmax.f32 %v418, 0.0
        %v441 = vmax.f32 %v423, 0.0
        %v442 = vmax.f32 %v428, 0.0
        %v443 = vmax.f32 %v433, 0.0
        %444 = vst.msk [vmem:[#allocation6] sm:$0xff] %vm306, %v436
        %445 = vst.msk [vmem:[#allocation6 + $0x8] sm:$0xff] %vm306, %v437
        %446 = vst.msk [vmem:[#allocation6 + $0x10] sm:$0xff] %vm306, %v438
        %447 = vst.msk [vmem:[#allocation6 + $0x18] sm:$0xff] %vm306, %v439
        %448 = vst.msk [vmem:[#allocation6 + $0x20] sm:$0xff] %vm306, %v440
        %449 = vst.msk [vmem:[#allocation6 + $0x28] sm:$0xff] %vm306, %v441
        %450 = vst.msk [vmem:[#allocation6 + $0x30] sm:$0xff] %vm306, %v442
        %451 = vst.msk [vmem:[#allocation6 + $0x38] sm:$0xff] %vm306, %v443
        %vm452 = vcmask 254977
        %453 = vst.msk [vmem:[#allocation6 + $0x3a] sm:$0x2] %vm452, %v443
        %v454 = vld [vmem:[#allocation6] ss:$2 sm:$0xff]
        %s455 = scalar_lea.vmem [#allocation6], 16
        %v456 = vld [vmem:[%s455] ss:$2 sm:$0xff]
        %s457 = scalar_lea.vmem [#allocation6], 32
        %v458 = vld [vmem:[%s457] ss:$2 sm:$0xff]
        %s459 = scalar_lea.vmem [#allocation6], 48
        %v460 = vld [vmem:[%s459] ss:$2 sm:$0x3f]
        %s461 = scalar_lea.vmem [#allocation6], 1
        %v462 = vld [vmem:[%s461] ss:$2 sm:$0xff]
        %s463 = scalar_lea.vmem [#allocation6], 17
        %v464 = vld [vmem:[%s463] ss:$2 sm:$0xff]
        %s465 = scalar_lea.vmem [#allocation6], 33
        %v466 = vld [vmem:[%s465] ss:$2 sm:$0xff]
        %s467 = scalar_lea.vmem [#allocation6], 49
        %v468 = vld [vmem:[%s467] ss:$2 sm:$0x3f]
        %v469 = vadd.f32 %v454, %v462
        %v470 = vadd.f32 %v456, %v464
        %v471 = vadd.f32 %v458, %v466
        %v472 = vadd.f32 %v460, %v468
        %v473 = vmul.f32 %v469, 0.5
        %v474 = vmul.f32 %v470, 0.5
        %v475 = vmul.f32 %v471, 0.5
        %v476 = vmul.f32 %v472, 0.5
        %477 = vst.msk [vmem:[#allocation2 + $0x1] sm:$0xff] %vm306, %v473
        %478 = vst.msk [vmem:[#allocation2 + $0x9] sm:$0xff] %vm306, %v474
        %479 = vst.msk [vmem:[#allocation2 + $0x11] sm:$0xff] %vm306, %v475
        %vm480 = vcmask 259072
        %481 = vst.msk [vmem:[#allocation2 + $0x19] sm:$0x3f] %vm480, %v476
        %v482 = vld [vmem:[#allocation2] sm:$0xff]
        %v483 = vld [vmem:[#allocation2 + $0x8] sm:$0xff]
        %v484 = vld [vmem:[#allocation2 + $0x10] sm:$0xff]
        %v485 = vld [vmem:[#allocation2 + $0x18] sm:$0x1]
        %v486 = vld [vmem:[#allocation2 + $0x1] sm:$0xff]
        %v487 = vld [vmem:[#allocation2 + $0x9] sm:$0xff]
        %v488 = vld [vmem:[#allocation2 + $0x11] sm:$0xff]
        %v489 = vld [vmem:[#allocation2 + $0x19] sm:$0x1]
        %v490 = vld [vmem:[#allocation2 + $0x2] sm:$0xff]
        %v491 = vld [vmem:[#allocation2 + $0xa] sm:$0xff]
        %v492 = vld [vmem:[#allocation2 + $0x12] sm:$0xff]
        %v493 = vld [vmem:[#allocation2 + $0x1a] sm:$0x1]
        %v494 = vld [vmem:[#allocation2 + $0x3] sm:$0xff]
        %v495 = vld [vmem:[#allocation2 + $0xb] sm:$0xff]
        %v496 = vld [vmem:[#allocation2 + $0x13] sm:$0xff]
        %v497 = vld [vmem:[#allocation2 + $0x1b] sm:$0x1]
        %502 = vrot.lane.b32.xlu0 %v486, 32
        %v503 = vpop.permute.xlu0 %502
        %504 = vrot.lane.b32.xlu0 %v487, 32
        %v505 = vpop.permute.xlu0 %504
        %506 = vrot.lane.b32.xlu0 %v488, 32
        %v507 = vpop.permute.xlu0 %506
        %508 = vrot.lane.b32.xlu0 %v489, 32
        %v509 = vpop.permute.xlu0 %508
        %518 = vrot.lane.b32.xlu0 %v490, 64
        %v519 = vpop.permute.xlu0 %518
        %520 = vrot.lane.b32.xlu0 %v491, 64
        %v521 = vpop.permute.xlu0 %520
        %522 = vrot.lane.b32.xlu0 %v492, 64
        %v523 = vpop.permute.xlu0 %522
        %524 = vrot.lane.b32.xlu0 %v493, 64
        %v525 = vpop.permute.xlu0 %524
        %534 = vrot.lane.b32.xlu0 %v494, 96
        %v535 = vpop.permute.xlu0 %534
        %536 = vrot.lane.b32.xlu0 %v495, 96
        %v537 = vpop.permute.xlu0 %536
        %538 = vrot.lane.b32.xlu0 %v496, 96
        %v539 = vpop.permute.xlu0 %538
        %540 = vrot.lane.b32.xlu0 %v497, 96
        %v541 = vpop.permute.xlu0 %540
        %v546 = vsel %vm306, %v482, %v503
        %v547 = vsel %vm306, %v483, %v505
        %v548 = vsel %vm306, %v484, %v507
        %v549 = vsel %vm306, %v485, %v509
        %vm550 = vcmask 523264
        %v551 = vsel %vm550, %v546, %v519
        %v552 = vsel %vm550, %v547, %v521
        %v553 = vsel %vm550, %v548, %v523
        %v554 = vsel %vm550, %v549, %v525
        %vm555 = vcmask 785408
        %v556 = vsel %vm555, %v551, %v535
        %v557 = vsel %vm555, %v552, %v537
        %v558 = vsel %vm555, %v553, %v539
        %v559 = vsel %vm555, %v554, %v541
        %560 = vst [vmem:[#allocation4] sm:$0xff] %v556
        %561 = vst [vmem:[#allocation4 + $0x10] sm:$0xff] %v557
        %562 = vst [vmem:[#allocation4 + $0x20] sm:$0xff] %v558
        %563 = vst [vmem:[#allocation4 + $0x30] sm:$0x1] %v559
        %v564 = vld [vmem:[#allocation2 + $0x4] sm:$0xff]
        %v565 = vld [vmem:[#allocation2 + $0xc] sm:$0xff]
        %v566 = vld [vmem:[#allocation2 + $0x14] sm:$0xff]
        %v567 = vld [vmem:[#allocation2 + $0x1c] sm:$0x1]
        %v568 = vld [vmem:[#allocation2 + $0x5] sm:$0xff]
        %v569 = vld [vmem:[#allocation2 + $0xd] sm:$0xff]
        %v570 = vld [vmem:[#allocation2 + $0x15] sm:$0xff]
        %v571 = vld [vmem:[#allocation2 + $0x1d] sm:$0x1]
        %v572 = vld [vmem:[#allocation2 + $0x6] sm:$0xff]
        %v573 = vld [vmem:[#allocation2 + $0xe] sm:$0xff]
        %v574 = vld [vmem:[#allocation2 + $0x16] sm:$0xff]
        %v575 = vld [vmem:[#allocation2 + $0x1e] sm:$0x1]
        %v576 = vld [vmem:[#allocation2 + $0x7] sm:$0xff]
        %v577 = vld [vmem:[#allocation2 + $0xf] sm:$0xff]
        %v578 = vld [vmem:[#allocation2 + $0x17] sm:$0xff]
        %v579 = vld [vmem:[#allocation2 + $0x1f] sm:$0x1]
        %584 = vrot.lane.b32.xlu0 %v568, 32
        %v585 = vpop.permute.xlu0 %584
        %586 = vrot.lane.b32.xlu0 %v569, 32
        %v587 = vpop.permute.xlu0 %586
        %588 = vrot.lane.b32.xlu0 %v570, 32
        %v589 = vpop.permute.xlu0 %588
        %590 = vrot.lane.b32.xlu0 %v571, 32
        %v591 = vpop.permute.xlu0 %590
        %600 = vrot.lane.b32.xlu0 %v572, 64
        %v601 = vpop.permute.xlu0 %600
        %602 = vrot.lane.b32.xlu0 %v573, 64
        %v603 = vpop.permute.xlu0 %602
        %604 = vrot.lane.b32.xlu0 %v574, 64
        %v605 = vpop.permute.xlu0 %604
        %606 = vrot.lane.b32.xlu0 %v575, 64
        %v607 = vpop.permute.xlu0 %606
        %616 = vrot.lane.b32.xlu0 %v576, 96
        %v617 = vpop.permute.xlu0 %616
        %618 = vrot.lane.b32.xlu0 %v577, 96
        %v619 = vpop.permute.xlu0 %618
        %620 = vrot.lane.b32.xlu0 %v578, 96
        %v621 = vpop.permute.xlu0 %620
        %622 = vrot.lane.b32.xlu0 %v579, 96
        %v623 = vpop.permute.xlu0 %622
        %v628 = vsel %vm306, %v564, %v585
        %v629 = vsel %vm306, %v565, %v587
        %v630 = vsel %vm306, %v566, %v589
        %v631 = vsel %vm306, %v567, %v591
        %v632 = vsel %vm550, %v628, %v601
        %v633 = vsel %vm550, %v629, %v603
        %v634 = vsel %vm550, %v630, %v605
        %v635 = vsel %vm550, %v631, %v607
        %v636 = vsel %vm555, %v632, %v617
        %v637 = vsel %vm555, %v633, %v619
        %v638 = vsel %vm555, %v634, %v621
        %v639 = vsel %vm555, %v635, %v623
        %640 = vst [vmem:[#allocation4 + $0x8] sm:$0xff] %v636
        %641 = vst [vmem:[#allocation4 + $0x18] sm:$0xff] %v637
        %642 = vst [vmem:[#allocation4 + $0x28] sm:$0xff] %v638
        %643 = vst [vmem:[#allocation4 + $0x38] sm:$0x1] %v639
        %v644 = vld [vmem:[#allocation4] sm:$0xff]
        %v645 = vld [vmem:[#allocation4 + $0x8] sm:$0xff]
        %v646 = vld [vmem:[#allocation4 + $0x10] sm:$0xff]
        %v647 = vld [vmem:[#allocation4 + $0x18] sm:$0xff]
        %v648 = vld [vmem:[#allocation4 + $0x20] sm:$0xff]
        %v649 = vld [vmem:[#allocation4 + $0x28] sm:$0xff]
        %v650 = vld [vmem:[#allocation4 + $0x30] sm:$0xff]
        %v651 = vld [vmem:[#allocation4 + $0x38] sm:$0xff]
        %v652 = vld [vmem:[%s3] sm:$0xff]
        %v653 = vld [vmem:[%s3 + $0x8] sm:$0xff]
        %v654 = vld [vmem:[%s3 + $0x10] sm:$0xff]
        %v655 = vld [vmem:[%s3 + $0x18] sm:$0xff]
        %v656 = vld [vmem:[%s3 + $0x20] sm:$0xff]
        %v657 = vld [vmem:[%s3 + $0x28] sm:$0xff]
        %v658 = vld [vmem:[%s3 + $0x30] sm:$0xff]
        %v659 = vld [vmem:[%s3 + $0x38] sm:$0xff]
        %v660 = vld [vmem:[%s3 + $0x40] sm:$0xff]
        %v661 = vld [vmem:[%s3 + $0x48] sm:$0xff]
        %v662 = vld [vmem:[%s3 + $0x50] sm:$0xff]
        %v663 = vld [vmem:[%s3 + $0x58] sm:$0xff]
        %v664 = vld [vmem:[%s3 + $0x60] sm:$0xff]
        %v665 = vld [vmem:[%s3 + $0x68] sm:$0xff]
        %v666 = vld [vmem:[%s3 + $0x70] sm:$0xff]
        %v667 = vld [vmem:[%s3 + $0x78] sm:$0xff]
        %v668 = vld [vmem:[%s3 + $0x80] sm:$0xff]
        %v669 = vld [vmem:[%s3 + $0x88] sm:$0xff]
        %v670 = vld [vmem:[%s3 + $0x90] sm:$0xff]
        %v671 = vld [vmem:[%s3 + $0x98] sm:$0xff]
        %v672 = vld [vmem:[%s3 + $0xa0] sm:$0xff]
        %v673 = vld [vmem:[%s3 + $0xa8] sm:$0xff]
        %v674 = vld [vmem:[%s3 + $0xb0] sm:$0xff]
        %v675 = vld [vmem:[%s3 + $0xb8] sm:$0xff]
        %v676 = vld [vmem:[%s3 + $0xc0] sm:$0xff]
        %v677 = vld [vmem:[%s3 + $0xc8] sm:$0xff]
        %v678 = vld [vmem:[%s3 + $0xd0] sm:$0xff]
        %v679 = vld [vmem:[%s3 + $0xd8] sm:$0xff]
        %v680 = vld [vmem:[%s3 + $0xe0] sm:$0xff]
        %v681 = vld [vmem:[%s3 + $0xe8] sm:$0xff]
        %v682 = vld [vmem:[%s3 + $0xf0] sm:$0xff]
        %v683 = vld [vmem:[%s3 + $0xf8] sm:$0xff]
        %v684 = vld [vmem:[%s4] sm:$0x1]
        %v686 = vlaneseq
        %v687 = vshrl.u32 %v686, 7
        %v688 = vsub.s32 0, %v687
        %v689 = vrot.slane %v684, %v688
        %691 = vmatprep.subr.mxu0 0.0
        %692 = vmatpush1.msra.mxu0 %v652
        %693 = vmatprep.subr.mxu0 0.0
        %694 = vmatpush1.msra.mxu0 %v653
        %695 = vmatprep.subr.mxu0 0.0
        %696 = vmatpush1.msra.mxu0 %v654
        %697 = vmatprep.subr.mxu0 0.0
        %698 = vmatpush1.msra.mxu0 %v655
        %699 = vmatprep.subr.mxu0 0.0
        %700 = vmatpush1.msra.mxu0 %v656
        %701 = vmatprep.subr.mxu0 0.0
        %702 = vmatpush1.msra.mxu0 %v657
        %703 = vmatprep.subr.mxu0 0.0
        %704 = vmatpush1.msra.mxu0 %v658
        %705 = vmatprep.subr.mxu0 0.0
        %706 = vmatpush1.msra.mxu0 %v659
        %707 = vmatprep.subr.mxu0 0.0
        %708 = vmatpush1.msra.mxu0 %v660
        %709 = vmatprep.subr.mxu0 0.0
        %710 = vmatpush1.msra.mxu0 %v661
        %711 = vmatprep.subr.mxu0 0.0
        %712 = vmatpush1.msra.mxu0 %v662
        %713 = vmatprep.subr.mxu0 0.0
        %714 = vmatpush1.msra.mxu0 %v663
        %715 = vmatprep.subr.mxu0 0.0
        %716 = vmatpush1.msra.mxu0 %v664
        %717 = vmatprep.subr.mxu0 0.0
        %718 = vmatpush1.msra.mxu0 %v665
        %719 = vmatprep.subr.mxu0 0.0
        %720 = vmatpush1.msra.mxu0 %v666
        %721 = vmatprep.subr.mxu0 0.0
        %722 = vmatpush1.msra.mxu0 %v667
        %723 = vmatprep.subr.mxu0 0.0
        %724 = vmatpush1.msra.mxu0 %v668
        %725 = vmatprep.subr.mxu0 0.0
        %726 = vmatpush1.msra.mxu0 %v669
        %727 = vmatprep.subr.mxu0 0.0
        %728 = vmatpush1.msra.mxu0 %v670
        %729 = vmatprep.subr.mxu0 0.0
        %730 = vmatpush1.msra.mxu0 %v671
        %731 = vmatprep.subr.mxu0 0.0
        %732 = vmatpush1.msra.mxu0 %v672
        %733 = vmatprep.subr.mxu0 0.0
        %734 = vmatpush1.msra.mxu0 %v673
        %735 = vmatprep.subr.mxu0 0.0
        %736 = vmatpush1.msra.mxu0 %v674
        %737 = vmatprep.subr.mxu0 0.0
        %738 = vmatpush1.msra.mxu0 %v675
        %739 = vmatprep.subr.mxu0 0.0
        %740 = vmatpush1.msra.mxu0 %v676
        %741 = vmatprep.subr.mxu0 0.0
        %742 = vmatpush1.msra.mxu0 %v677
        %743 = vmatprep.subr.mxu0 0.0
        %744 = vmatpush1.msra.mxu0 %v678
        %745 = vmatprep.subr.mxu0 0.0
        %746 = vmatpush1.msra.mxu0 %v679
        %747 = vmatprep.subr.mxu0 0.0
        %748 = vmatpush1.msra.mxu0 %v680
        %749 = vmatprep.subr.mxu0 0.0
        %750 = vmatpush1.msra.mxu0 %v681
        %751 = vmatprep.subr.mxu0 0.0
        %752 = vmatpush1.msra.mxu0 %v682
        %753 = vmatprep.subr.mxu0 0.0
        %754 = vmatpush1.msra.mxu0 %v683
        %755 = vmatprep.mubr.f32.mxu0 %v645
        %756 = vmatmul.mubr.f32.gmra.mrb[0].mxu0 %v644
        %v757 = vpop.f32.mrb[0].mxu0
        %v758 = vadd.f32 %v689, %v757
        %v759 = vpop.f32.mrb[0].mxu0
        %760 = vmatprep.mubr.f32.mxu0 %v647
        %761 = vmatmul.mubr.f32.gmra.mrb[0].mxu0 %v646
        %v762 = vpop.f32.mrb[0].mxu0
        %v763 = vadd.f32 %v689, %v762
        %v764 = vpop.f32.mrb[0].mxu0
        %765 = vmatprep.mubr.f32.mxu0 %v649
        %766 = vmatmul.mubr.f32.gmra.mrb[0].mxu0 %v648
        %v767 = vpop.f32.mrb[0].mxu0
        %v768 = vadd.f32 %v689, %v767
        %v769 = vpop.f32.mrb[0].mxu0
        %770 = vmatprep.mubr.f32.mxu0 %v651
        %771 = vmatmul.mubr.f32.gmra.mrb[0].mxu0 %v650
        %v772 = vpop.f32.mrb[0].mxu0
        %v773 = vadd.f32 %v689, %v772
        %v774 = vpop.f32.mrb[0].mxu0
        %775 = vdwg.mxu0
        %v776 = vmax.f32 %v758, 0.0
        %v777 = vmax.f32 %v763, 0.0
        %v778 = vmax.f32 %v768, 0.0
        %v779 = vmax.f32 %v773, 0.0
        %780 = vst.msk [vmem:[#allocation7] sm:$0xff] %vm550, %v776
        %781 = vst.msk [vmem:[#allocation7 + $0x8] sm:$0xff] %vm550, %v777
        %782 = vst.msk [vmem:[#allocation7 + $0x10] sm:$0xff] %vm550, %v778
        %783 = vst.msk [vmem:[#allocation7 + $0x18] sm:$0xff] %vm550, %v779
        %vm784 = vcmask 523271
        %785 = vst.msk [vmem:[#allocation7 + $0x12] sm:$0x80] %vm784, %v778
        %v786 = vld [vmem:[#allocation7] ss:$2 sm:$0xff]
        %s787 = scalar_lea.vmem [#allocation7], 16
        %v788 = vld [vmem:[%s787] ss:$2 sm:$0x1f]
        %s789 = scalar_lea.vmem [#allocation7], 1
        %v790 = vld [vmem:[%s789] ss:$2 sm:$0xff]
        %s791 = scalar_lea.vmem [#allocation7], 17
        %v792 = vld [vmem:[%s791] ss:$2 sm:$0x1f]
        %v793 = vadd.f32 %v786, %v790
        %v794 = vadd.f32 %v788, %v792
        %v795 = vmul.f32 %v793, 0.5
        %v796 = vmul.f32 %v794, 0.5
        %797 = vst.msk [vmem:[#allocation3 + $0x1] sm:$0xff] %vm550, %v795
        %vm798 = vcmask 520192
        %799 = vst.msk [vmem:[#allocation3 + $0x9] sm:$0x1f] %vm798, %v796
        %v800 = vld [vmem:[#allocation3] sm:$0xff]
        %v801 = vld [vmem:[#allocation3 + $0x1] sm:$0xff]
        %803 = vrot.lane.b32.xlu0 %v801, 64
        %v804 = vpop.permute.xlu0 %803
        %v806 = vsel %vm550, %v800, %v804
        %807 = vst [vmem:[#allocation5] sm:$0xff] %v806
        %v808 = vld [vmem:[#allocation3 + $0x2] sm:$0xff]
        %v809 = vld [vmem:[#allocation3 + $0x3] sm:$0xff]
        %811 = vrot.lane.b32.xlu0 %v809, 64
        %v812 = vpop.permute.xlu0 %811
        %v814 = vsel %vm550, %v808, %v812
        %815 = vst [vmem:[#allocation5 + $0x8] sm:$0xff] %v814
        %v816 = vld [vmem:[#allocation3 + $0x4] sm:$0xff]
        %v817 = vld [vmem:[#allocation3 + $0x5] sm:$0xff]
        %819 = vrot.lane.b32.xlu0 %v817, 64
        %v820 = vpop.permute.xlu0 %819
        %v822 = vsel %vm550, %v816, %v820
        %823 = vst [vmem:[#allocation5 + $0x10] sm:$0xff] %v822
        %v824 = vld [vmem:[#allocation3 + $0x6] sm:$0xff]
        %v825 = vld [vmem:[#allocation3 + $0x7] sm:$0xff]
        %827 = vrot.lane.b32.xlu0 %v825, 64
        %v828 = vpop.permute.xlu0 %827
        %v830 = vsel %vm550, %v824, %v828
        %831 = vst [vmem:[#allocation5 + $0x18] sm:$0xff] %v830
        %v832 = vld [vmem:[#allocation5] sm:$0xff]
        %v833 = vld [vmem:[#allocation5 + $0x8] sm:$0xff]
        %v834 = vld [vmem:[#allocation5 + $0x10] sm:$0xff]
        %v835 = vld [vmem:[#allocation5 + $0x18] sm:$0xff]
        %v836 = vld [vmem:[%s5] sm:$0xff]
        %v837 = vld [vmem:[%s5 + $0x8] sm:$0xff]
        %v838 = vld [vmem:[%s5 + $0x10] sm:$0xff]
        %v839 = vld [vmem:[%s5 + $0x18] sm:$0xff]
        %v840 = vld [vmem:[%s5 + $0x20] sm:$0xff]
        %v841 = vld [vmem:[%s5 + $0x28] sm:$0xff]
        %v842 = vld [vmem:[%s5 + $0x30] sm:$0xff]
        %v843 = vld [vmem:[%s5 + $0x38] sm:$0xff]
        %v844 = vld [vmem:[%s5 + $0x40] sm:$0xff]
        %v845 = vld [vmem:[%s5 + $0x48] sm:$0xff]
        %v846 = vld [vmem:[%s5 + $0x50] sm:$0xff]
        %v847 = vld [vmem:[%s5 + $0x58] sm:$0xff]
        %v848 = vld [vmem:[%s5 + $0x60] sm:$0xff]
        %v849 = vld [vmem:[%s5 + $0x68] sm:$0xff]
        %v850 = vld [vmem:[%s5 + $0x70] sm:$0xff]
        %v851 = vld [vmem:[%s5 + $0x78] sm:$0xff]
        %v852 = vld [vmem:[%s5 + $0x80] sm:$0xff]
        %v853 = vld [vmem:[%s5 + $0x88] sm:$0xff]
        %v854 = vld [vmem:[%s5 + $0x90] sm:$0xff]
        %v855 = vld [vmem:[%s5 + $0x98] sm:$0xff]
        %v856 = vld [vmem:[%s5 + $0xa0] sm:$0xff]
        %v857 = vld [vmem:[%s5 + $0xa8] sm:$0xff]
        %v858 = vld [vmem:[%s5 + $0xb0] sm:$0xff]
        %v859 = vld [vmem:[%s5 + $0xb8] sm:$0xff]
        %v860 = vld [vmem:[%s5 + $0xc0] sm:$0xff]
        %v861 = vld [vmem:[%s5 + $0xc8] sm:$0xff]
        %v862 = vld [vmem:[%s5 + $0xd0] sm:$0xff]
        %v863 = vld [vmem:[%s5 + $0xd8] sm:$0xff]
        %v864 = vld [vmem:[%s5 + $0xe0] sm:$0xff]
        %v865 = vld [vmem:[%s5 + $0xe8] sm:$0xff]
        %v866 = vld [vmem:[%s5 + $0xf0] sm:$0xff]
        %v867 = vld [vmem:[%s5 + $0xf8] sm:$0xff]
        %v868 = vld [vmem:[%s5 + $0x100] sm:$0xff]
        %v869 = vld [vmem:[%s5 + $0x108] sm:$0xff]
        %v870 = vld [vmem:[%s5 + $0x110] sm:$0xff]
        %v871 = vld [vmem:[%s5 + $0x118] sm:$0xff]
        %v872 = vld [vmem:[%s5 + $0x120] sm:$0xff]
        %v873 = vld [vmem:[%s5 + $0x128] sm:$0xff]
        %v874 = vld [vmem:[%s5 + $0x130] sm:$0xff]
        %v875 = vld [vmem:[%s5 + $0x138] sm:$0xff]
        %v876 = vld [vmem:[%s5 + $0x140] sm:$0xff]
        %v877 = vld [vmem:[%s5 + $0x148] sm:$0xff]
        %v878 = vld [vmem:[%s5 + $0x150] sm:$0xff]
        %v879 = vld [vmem:[%s5 + $0x158] sm:$0xff]
        %v880 = vld [vmem:[%s5 + $0x160] sm:$0xff]
        %v881 = vld [vmem:[%s5 + $0x168] sm:$0xff]
        %v882 = vld [vmem:[%s5 + $0x170] sm:$0xff]
        %v883 = vld [vmem:[%s5 + $0x178] sm:$0xff]
        %v884 = vld [vmem:[%s5 + $0x180] sm:$0xff]
        %v885 = vld [vmem:[%s5 + $0x188] sm:$0xff]
        %v886 = vld [vmem:[%s5 + $0x190] sm:$0xff]
        %v887 = vld [vmem:[%s5 + $0x198] sm:$0xff]
        %v888 = vld [vmem:[%s5 + $0x1a0] sm:$0xff]
        %v889 = vld [vmem:[%s5 + $0x1a8] sm:$0xff]
        %v890 = vld [vmem:[%s5 + $0x1b0] sm:$0xff]
        %v891 = vld [vmem:[%s5 + $0x1b8] sm:$0xff]
        %v892 = vld [vmem:[%s5 + $0x1c0] sm:$0xff]
        %v893 = vld [vmem:[%s5 + $0x1c8] sm:$0xff]
        %v894 = vld [vmem:[%s5 + $0x1d0] sm:$0xff]
        %v895 = vld [vmem:[%s5 + $0x1d8] sm:$0xff]
        %v896 = vld [vmem:[%s5 + $0x1e0] sm:$0xff]
        %v897 = vld [vmem:[%s5 + $0x1e8] sm:$0xff]
        %v898 = vld [vmem:[%s5 + $0x1f0] sm:$0xff]
        %v899 = vld [vmem:[%s5 + $0x1f8] sm:$0xff]
        %v900 = vld [vmem:[%s6] sm:$0x1]
        %v902 = vlaneseq
        %v903 = vshrl.u32 %v902, 7
        %v904 = vsub.s32 0, %v903
        %v905 = vrot.slane %v900, %v904
        %907 = vmatprep.subr.mxu0 0.0
        %908 = vmatpush1.msra.mxu0 %v836
        %909 = vmatprep.subr.mxu0 0.0
        %910 = vmatpush1.msra.mxu0 %v837
        %911 = vmatprep.subr.mxu0 0.0
        %912 = vmatpush1.msra.mxu0 %v838
        %913 = vmatprep.subr.mxu0 0.0
        %914 = vmatpush1.msra.mxu0 %v839
        %915 = vmatprep.subr.mxu0 0.0
        %916 = vmatpush1.msra.mxu0 %v840
        %917 = vmatprep.subr.mxu0 0.0
        %918 = vmatpush1.msra.mxu0 %v841
        %919 = vmatprep.subr.mxu0 0.0
        %920 = vmatpush1.msra.mxu0 %v842
        %921 = vmatprep.subr.mxu0 0.0
        %922 = vmatpush1.msra.mxu0 %v843
        %923 = vmatprep.subr.mxu0 0.0
        %924 = vmatpush1.msra.mxu0 %v844
        %925 = vmatprep.subr.mxu0 0.0
        %926 = vmatpush1.msra.mxu0 %v845
        %927 = vmatprep.subr.mxu0 0.0
        %928 = vmatpush1.msra.mxu0 %v846
        %929 = vmatprep.subr.mxu0 0.0
        %930 = vmatpush1.msra.mxu0 %v847
        %931 = vmatprep.subr.mxu0 0.0
        %932 = vmatpush1.msra.mxu0 %v848
        %933 = vmatprep.subr.mxu0 0.0
        %934 = vmatpush1.msra.mxu0 %v849
        %935 = vmatprep.subr.mxu0 0.0
        %936 = vmatpush1.msra.mxu0 %v850
        %937 = vmatprep.subr.mxu0 0.0
        %938 = vmatpush1.msra.mxu0 %v851
        %939 = vmatprep.subr.mxu0 0.0
        %940 = vmatpush1.msra.mxu0 %v852
        %941 = vmatprep.subr.mxu0 0.0
        %942 = vmatpush1.msra.mxu0 %v853
        %943 = vmatprep.subr.mxu0 0.0
        %944 = vmatpush1.msra.mxu0 %v854
        %945 = vmatprep.subr.mxu0 0.0
        %946 = vmatpush1.msra.mxu0 %v855
        %947 = vmatprep.subr.mxu0 0.0
        %948 = vmatpush1.msra.mxu0 %v856
        %949 = vmatprep.subr.mxu0 0.0
        %950 = vmatpush1.msra.mxu0 %v857
        %951 = vmatprep.subr.mxu0 0.0
        %952 = vmatpush1.msra.mxu0 %v858
        %953 = vmatprep.subr.mxu0 0.0
        %954 = vmatpush1.msra.mxu0 %v859
        %955 = vmatprep.subr.mxu0 0.0
        %956 = vmatpush1.msra.mxu0 %v860
        %957 = vmatprep.subr.mxu0 0.0
        %958 = vmatpush1.msra.mxu0 %v861
        %959 = vmatprep.subr.mxu0 0.0
        %960 = vmatpush1.msra.mxu0 %v862
        %961 = vmatprep.subr.mxu0 0.0
        %962 = vmatpush1.msra.mxu0 %v863
        %963 = vmatprep.subr.mxu0 0.0
        %964 = vmatpush1.msra.mxu0 %v864
        %965 = vmatprep.subr.mxu0 0.0
        %966 = vmatpush1.msra.mxu0 %v865
        %967 = vmatprep.subr.mxu0 0.0
        %968 = vmatpush1.msra.mxu0 %v866
        %969 = vmatprep.subr.mxu0 0.0
        %970 = vmatpush1.msra.mxu0 %v867
        %971 = vmatprep.mubr.f32.mxu0 %v833
        %972 = vmatmul.mubr.f32.gmra.mrb[0].mxu0 %v832
        %v973 = vpop.f32.mrb[0].mxu0
        %v974 = vadd.f32 %v905, %v973
        %v975 = vpop.f32.mrb[0].mxu0
        %976 = vdwg.mxu0
        %977 = vmatprep.subr.mxu0 0.0
        %978 = vmatpush1.msra.mxu0 %v868
        %979 = vmatprep.subr.mxu0 0.0
        %980 = vmatpush1.msra.mxu0 %v869
        %981 = vmatprep.subr.mxu0 0.0
        %982 = vmatpush1.msra.mxu0 %v870
        %983 = vmatprep.subr.mxu0 0.0
        %984 = vmatpush1.msra.mxu0 %v871
        %985 = vmatprep.subr.mxu0 0.0
        %986 = vmatpush1.msra.mxu0 %v872
        %987 = vmatprep.subr.mxu0 0.0
        %988 = vmatpush1.msra.mxu0 %v873
        %989 = vmatprep.subr.mxu0 0.0
        %990 = vmatpush1.msra.mxu0 %v874
        %991 = vmatprep.subr.mxu0 0.0
        %992 = vmatpush1.msra.mxu0 %v875
        %993 = vmatprep.subr.mxu0 0.0
        %994 = vmatpush1.msra.mxu0 %v876
        %995 = vmatprep.subr.mxu0 0.0
        %996 = vmatpush1.msra.mxu0 %v877
        %997 = vmatprep.subr.mxu0 0.0
        %998 = vmatpush1.msra.mxu0 %v878
        %999 = vmatprep.subr.mxu0 0.0
        %1000 = vmatpush1.msra.mxu0 %v879
        %1001 = vmatprep.subr.mxu0 0.0
        %1002 = vmatpush1.msra.mxu0 %v880
        %1003 = vmatprep.subr.mxu0 0.0
        %1004 = vmatpush1.msra.mxu0 %v881
        %1005 = vmatprep.subr.mxu0 0.0
        %1006 = vmatpush1.msra.mxu0 %v882
        %1007 = vmatprep.subr.mxu0 0.0
        %1008 = vmatpush1.msra.mxu0 %v883
        %1009 = vmatprep.subr.mxu0 0.0
        %1010 = vmatpush1.msra.mxu0 %v884
        %1011 = vmatprep.subr.mxu0 0.0
        %1012 = vmatpush1.msra.mxu0 %v885
        %1013 = vmatprep.subr.mxu0 0.0
        %1014 = vmatpush1.msra.mxu0 %v886
        %1015 = vmatprep.subr.mxu0 0.0
        %1016 = vmatpush1.msra.mxu0 %v887
        %1017 = vmatprep.subr.mxu0 0.0
        %1018 = vmatpush1.msra.mxu0 %v888
        %1019 = vmatprep.subr.mxu0 0.0
        %1020 = vmatpush1.msra.mxu0 %v889
        %1021 = vmatprep.subr.mxu0 0.0
        %1022 = vmatpush1.msra.mxu0 %v890
        %1023 = vmatprep.subr.mxu0 0.0
        %1024 = vmatpush1.msra.mxu0 %v891
        %1025 = vmatprep.subr.mxu0 0.0
        %1026 = vmatpush1.msra.mxu0 %v892
        %1027 = vmatprep.subr.mxu0 0.0
        %1028 = vmatpush1.msra.mxu0 %v893
        %1029 = vmatprep.subr.mxu0 0.0
        %1030 = vmatpush1.msra.mxu0 %v894
        %1031 = vmatprep.subr.mxu0 0.0
        %1032 = vmatpush1.msra.mxu0 %v895
        %1033 = vmatprep.subr.mxu0 0.0
        %1034 = vmatpush1.msra.mxu0 %v896
        %1035 = vmatprep.subr.mxu0 0.0
        %1036 = vmatpush1.msra.mxu0 %v897
        %1037 = vmatprep.subr.mxu0 0.0
        %1038 = vmatpush1.msra.mxu0 %v898
        %1039 = vmatprep.subr.mxu0 0.0
        %1040 = vmatpush1.msra.mxu0 %v899
        %1041 = vmatprep.mubr.f32.mxu0 %v835
        %1042 = vmatmul.mubr.f32.gmra.mrb[0].mxu0 %v834
        %v1043 = vpop.f32.mrb[0].mxu0
        %v1044 = vadd.f32 %v974, %v1043
        %v1045 = vpop.f32.mrb[0].mxu0
        %1046 = vdwg.mxu0
        %v1047 = vmax.f32 %v1044, 0.0
        %1048 = vst [vmem:[#allocation8] sm:$0xff] %v1047
        %v1049 = vld [vmem:[#allocation8] ss:$2 sm:$0xf]
        %s1050 = scalar_lea.vmem [#allocation8], 1
        %v1051 = vld [vmem:[%s1050] ss:$2 sm:$0xf]
        %v1052 = vadd.f32 %v1049, %v1051
        %v1053 = vmul.f32 %v1052, 0.5
        %1054 = vst [vmem:[%s272] sm:$0xf] %v1053
        %s1055 = sand.u32 %s181, 1
        %s1056 = scalar_lea.sflag [#allocation10], %s1055
        %s1057 = sand.u32 %s181, 1
        %s1058 = smul.addr %s1057, 4
        %s1059 = scalar_lea.vmem [#allocation9], %s1058
        // Predicated region
        $region49: #{fcn_blur_forward.1} parent=47 // pred_check
          %p1060 = pneg %p191
        $region50: #{fcn_blur_forward.1} parent=47 // pred_check_branch
          %1062 = sbr.rel (%p1060) target = $region52
        $region51: #{fcn_blur_forward.1} parent=47 // pred_region
          %s1064 = ssub.s32 64, 64
          %1065 = vsyncadd %s1056, %s1064
          %s1066 = smul.addr %s21, 64
          %s1067 = scalar_lea.hbm %s7, %s1066
          %s1069 = sshll.u32 %s1059, 4
          %s1070 = int_to_ptr.vmem [resolvable:$true] %s1069
          %1072 = dma.vmem_to_hbm [thread:$0]  %s1070, 64, %s1067, %s1056
        $region52: #{fcn_blur_forward.1} parent=47 // pred_fallthru
          _
      $region48: #{fcn_blur_forward.1} parent=5 // pred_fallthru
        _
      %p1073 = scmp.le.s32.totalorder 2, %s16
      // Predicated region
      $region53: #{fcn_blur_forward.1} parent=5 // pred_check
        %p1074 = pneg %p1073
      $region54: #{fcn_blur_forward.1} parent=5 // pred_check_branch
        %1076 = sbr.rel (%p1074) target = $region56
      $region55: #{fcn_blur_forward.1} parent=5 // pred_region
        %s1077 = ssub.s32 %s16, 2
        // Predicated region
        $region57: #{fcn_blur_forward.1} parent=55 // pred_check
          %p1078 = pneg %p197
        $region58: #{fcn_blur_forward.1} parent=55 // pred_check_branch
          %1080 = sbr.rel (%p1078) target = $region60
        $region59: #{fcn_blur_forward.1} parent=55 // pred_region
          %s1081 = sand.u32 %s182, 1
          %s1082 = scalar_lea.sflag [#allocation10], %s1081
          %s1083 = sand.u32 %s182, 1
          %s1084 = smul.addr %s1083, 4
          %s1085 = scalar_lea.vmem [#allocation9], %s1084
          %1086 = dma.done %s1082, 64
        $region60: #{fcn_blur_forward.1} parent=55 // pred_fallthru
          _
      $region56: #{fcn_blur_forward.1} parent=5 // pred_fallthru
        _
    $region6: #{fcn_blur_forward.1} parent=1 // loop_footer
      %s20 = sadd.s32 1, %s16
    $region7: #{fcn_blur_forward.1} parent=1 // loop_footer_branch
      %15 = sbr.rel target = $region3
    $region8: #{fcn_blur_forward.1} parent=1 // loop_exit
      _
    %1087 = vsyncpa [#allocation10], 1
    %s1088 = scalar_lea.sflag [#allocation10], 1
    %1089 = vsyncpa %s1088, 1

</llo_original>
